<compile_context>
chip_gen: v5e
topology: v5e:2x2
jax: 0.10.0
libtpu: 0.0.40
codegen_flags: <defaults>
</compile_context>

<pallas_src>
import numpy as np
import jax
import jax.numpy as jnp
from jax.experimental import pallas as pl
from jax.experimental.pallas import tpu as pltpu


def _round_up(n, m):
  return ((n + m - 1) // m) * m


def _full_spec(a):
  nd = a.ndim
  return pl.BlockSpec(a.shape, lambda i, _nd=nd: (0,) * _nd)


# --------------------------------------------------------------- wrapper -----

@jax.jit
def gcn_forward(x, p):
  B, C, J = x.shape
  NC = p["cls_w"].shape[0]
  eps = 1e-5
  f32 = jnp.float32

  # ---- static tiling choices ------------------------------------------------
  TB = 4 if B % 4 == 0 else (2 if B % 2 == 0 else 1)    # batches per grid step
  L1, L2, L3 = J // 8, J // 16, J // 32
  NCPAD = _round_up(NC, 128)                            # lane-dense output
  SEG = max(NCPAD, _round_up(TB * L1, 128))             # row-bias slab segment
  TBL = (TB * L1, TB * L2, TB * L3)

  # ---- eval-mode BatchNorm folded into the conv weights ----------------------
  def bn_affine(prefix):
    scale = p[prefix + "_gamma"] / jnp.sqrt(p[prefix + "_var"] + eps)
    shift = p[prefix + "_beta"] - p[prefix + "_mean"] * scale
    return scale, shift

  bn1_s, bn1_h = bn_affine("bn1")
  bn2_s, bn2_h = bn_affine("bn2")

  def stacked(conv_w, conv_b, bn_scale, q_w, q_b, k_w, k_b):
    # rows 0..C-1: bn-scale-folded conv, row C: mean(conv_q), row C+1: mean(conv_k)
    sw = jnp.concatenate([conv_w * bn_scale[:, None],
                          q_w.mean(axis=0)[None, :],
                          k_w.mean(axis=0)[None, :]], axis=0)            # (C+2, C)
    sb = jnp.concatenate([conv_b * bn_scale,
                          q_b.mean()[None], k_b.mean()[None]])           # (C+2,)
    return sw, sb

  sw1, sb1 = stacked(p["conv1_w"], p["conv1_b"], bn1_s,
                     p["q1_w"], p["q1_b"], p["k1_w"], p["k1_b"])
  sw2, sb2 = stacked(p["conv2_w"], p["conv2_b"], bn2_s,
                     p["q2_w"], p["q2_b"], p["k2_w"], p["k2_b"])
  # stage 3 reuses conv2 / batch_norm2, as in the reference forward
  sw3, sb3 = stacked(p["conv2_w"], p["conv2_b"], bn2_s,
                     p["q3_w"], p["q3_b"], p["k3_w"], p["k3_b"])
  sw_all = jnp.stack([sw1, sw2, sw3], axis=0)                            # (3, C+2, C)

  pad2 = lambda v: jnp.concatenate([v, jnp.zeros((2,), f32)])
  col_slab = jnp.stack([sb1, sb2, sb3,
                        pad2(bn1_h), pad2(bn2_h), pad2(bn2_h)], axis=1)  # (C+2, 6)

  # ---- block-diagonal (batch-in-lanes) pool / adjacency weights --------------
  eye = jnp.eye(TB, dtype=f32)
  bd = lambda w: jnp.kron(eye, w.astype(f32))

  p1_bd = bd(p["pool1_w"].T)                  # (TB*J,  TB*L1)
  p2_bd = bd(p["pool2_w"].T)                  # (TB*L1, TB*L2)
  p3_bd = bd(p["pool3_w"].T)                  # (TB*L2, TB*L3)
  p4_bd = bd(p["pool4_w"].T)                  # (TB*L3, TB)

  def adjmask(adj, alpha, L):
    # [0] = block-diag adjacency, [1] = alpha * block-diag mask for the tanh term
    return jnp.stack([bd(adj), bd(jnp.ones((L, L), f32)) * alpha], axis=0)

  am1 = adjmask(p["adj1"], p["alpha1"], L1)   # (2, TB*L1, TB*L1)
  am2 = adjmask(p["adj2"], p["alpha2"], L2)
  am3 = adjmask(p["adj3"], p["alpha3"], L3)

  # ---- row-vector biases: one lane-dense slab, 128-aligned segments ----------
  def seg(v):
    v = v.reshape(1, -1)
    return jnp.pad(v, ((0, 0), (0, SEG - v.shape[1])))

  clsb_eff = p["cls_b"] + p["pool4_b"][0] * p["cls_w"].sum(axis=1)   # pool4 bias folded
  row_slab = jnp.concatenate([seg(jnp.tile(p["pool1_b"], TB)),
                              seg(jnp.tile(p["pool2_b"], TB)),
                              seg(jnp.tile(p["pool3_b"], TB)),
                              seg(jnp.pad(clsb_eff, (0, NCPAD - NC)))], axis=1)

  clsT_pad = jnp.pad(p["cls_w"].T, ((0, 0), (0, NCPAD - NC)))        # (C, NCPAD)

  # ---- kernel -----------------------------------------------------------------
  def kernel(x_ref, p1_ref, p2_ref, p3_ref, p4_ref, sw_ref,
             am1_ref, am2_ref, am3_ref, col_ref, row_ref, cls_ref, out_ref):

    def stage(x, p_bd, s, am_ref):
      pb = row_ref[:, s * SEG:s * SEG + TBL[s]]                        # (1, TB*L)
      xp = jnp.dot(x, p_bd, preferred_element_type=jnp.float32) + pb   # (C, TB*L)
      # fused (conv | q-mean | k-mean) channel mix, one MXU push
      z = jnp.dot(sw_ref[s], xp,
                  preferred_element_type=jnp.float32) + col_ref[:, s:s + 1]
      qm = z[C:C + 1, :]                                               # (1, TB*L)
      km = z[C + 1:C + 2, :]                                           # (1, TB*L)
      A = am_ref[0] + jnp.tanh(jnp.transpose(qm) - km) * am_ref[1]     # block-diag A
      bn_shift = col_ref[:C, 3 + s:4 + s]                              # (C, 1)
      return jnp.dot(z[:C, :], A,
                     preferred_element_type=jnp.float32) + bn_shift    # (C, TB*L)

    x = x_ref[...]                                                     # (C, TB*J)
    x = stage(x, p1_ref[...], 0, am1_ref)
    x = stage(x, p2_ref[...], 1, am2_ref)
    x = stage(x, p3_ref[...], 2, am3_ref)                              # (C, TB*L3)

    feat = jnp.dot(x, p4_ref[...], preferred_element_type=jnp.float32)  # (C, TB)
    logits = jnp.dot(jnp.transpose(feat), cls_ref[...],
                     preferred_element_type=jnp.float32)                # (TB, NCPAD)
    out_ref[0] = logits + row_ref[:, 3 * SEG:3 * SEG + NCPAD]

  # batch axis into lanes: (B, C, J) -> (C, B*J)   (layout plumbing only)
  x_lanes = jnp.transpose(x, (1, 0, 2)).reshape(C, B * J)

  args = (x_lanes, p1_bd, p2_bd, p3_bd, p4_bd, sw_all,
          am1, am2, am3, col_slab, row_slab, clsT_pad)
  in_specs = [pl.BlockSpec((C, TB * J), lambda i: (0, i))]
  in_specs += [_full_spec(a) for a in args[1:]]

  out = pl.pallas_call(
      kernel,
      grid=(B // TB,),
      in_specs=in_specs,
      out_specs=pl.BlockSpec((1, TB, NCPAD), lambda i: (i, 0, 0)),
      out_shape=jax.ShapeDtypeStruct((B // TB, TB, NCPAD), f32),
      compiler_params=pltpu.CompilerParams(dimension_semantics=("parallel",)),
  )(*args)
  return out.reshape(B, NCPAD)[:, :NC]


# --------------------------------------------------- deterministic params ----

def init_params(key, num_joints, in_features, num_classes):
  J1, J2, J3 = num_joints // 8, num_joints // 16, num_joints // 32
  C, C4 = in_features, in_features // 4
  keys = iter(jax.random.split(key, 64))
  w = lambda shape, s=0.05: s * jax.random.normal(next(keys), shape, jnp.float32)

  p = {}
  # stage 1
  p["pool1_w"], p["pool1_b"] = w((J1, num_joints)), w((J1,))
  p["adj1"] = jnp.eye(J1, dtype=jnp.float32) / 100.0 + 1.0 / 100.0
  p["conv1_w"], p["conv1_b"] = w((C, C)), w((C,))
  p["bn1_gamma"], p["bn1_beta"] = 1.0 + w((C,)), w((C,))
  p["bn1_mean"], p["bn1_var"] = jnp.zeros((C,), jnp.float32), jnp.ones((C,), jnp.float32)
  p["q1_w"], p["q1_b"] = w((C4, C)), w((C4,))
  p["k1_w"], p["k1_b"] = w((C4, C)), w((C4,))
  p["alpha1"] = jnp.float32(0.2)   # PyTorch init is 0; nonzero to exercise the branch
  # stage 2
  p["pool2_w"], p["pool2_b"] = w((J2, J1)), w((J2,))
  p["adj2"] = jnp.eye(J2, dtype=jnp.float32) / 32.0 + 1.0 / 32.0
  p["conv2_w"], p["conv2_b"] = w((C, C)), w((C,))
  p["bn2_gamma"], p["bn2_beta"] = 1.0 + w((C,)), w((C,))
  p["bn2_mean"], p["bn2_var"] = jnp.zeros((C,), jnp.float32), jnp.ones((C,), jnp.float32)
  p["q2_w"], p["q2_b"] = w((C4, C)), w((C4,))
  p["k2_w"], p["k2_b"] = w((C4, C)), w((C4,))
  p["alpha2"] = jnp.float32(0.2)
  # stage 3 (conv3 / batch_norm3 exist in __init__ but are unused in forward)
  p["pool3_w"], p["pool3_b"] = w((J3, J2)), w((J3,))
  p["adj3"] = jnp.eye(J3, dtype=jnp.float32) / 32.0 + 1.0 / 32.0
  p["q3_w"], p["q3_b"] = w((C4, C)), w((C4,))
  p["k3_w"], p["k3_b"] = w((C4, C)), w((C4,))
  p["alpha3"] = jnp.float32(0.2)
  # head
  p["pool4_w"], p["pool4_b"] = w((1, J3)), w((1,))
  p["cls_w"], p["cls_b"] = w((num_classes, C)), w((num_classes,))
  return p


# ----------------------------------------------------------- JAX reference ---

def gcn_reference(x, p):
  eps = 1e-5

  def bn(x, prefix):
    scale = p[prefix + "_gamma"] / jnp.sqrt(p[prefix + "_var"] + eps)
    shift = p[prefix + "_beta"] - p[prefix + "_mean"] * scale
    return x * scale[None, :, None] + shift[None, :, None]

  lin = lambda x, w, b: jnp.einsum("bcj,kj->bck", x, w) + b[None, None, :]
  conv = lambda x, w, b: jnp.einsum("oc,bcj->boj", w, x) + b[None, :, None]

  def stage(x, pw, pb, adj, cw, cb, qw, qb, kw, kb, alpha, bn_name):
    x = lin(x, pw, pb)
    q = conv(x, qw, qb).mean(1)
    k = conv(x, kw, kb).mean(1)
    A = jnp.tanh(q[:, :, None] - k[:, None, :])
    A = adj[None] + A * alpha
    x = conv(x, cw, cb)
    x = jnp.einsum("bcj,bjk->bck", x, A)
    return bn(x, bn_name)

  x = stage(x, p["pool1_w"], p["pool1_b"], p["adj1"], p["conv1_w"], p["conv1_b"],
            p["q1_w"], p["q1_b"], p["k1_w"], p["k1_b"], p["alpha1"], "bn1")
  x = stage(x, p["pool2_w"], p["pool2_b"], p["adj2"], p["conv2_w"], p["conv2_b"],
            p["q2_w"], p["q2_b"], p["k2_w"], p["k2_b"], p["alpha2"], "bn2")
  x = stage(x, p["pool3_w"], p["pool3_b"], p["adj3"], p["conv2_w"], p["conv2_b"],
            p["q3_w"], p["q3_b"], p["k3_w"], p["k3_b"], p["alpha3"], "bn2")
  x = lin(x, p["pool4_w"], p["pool4_b"])[:, :, 0]           # (B, C)
  return x @ p["cls_w"].T + p["cls_b"][None, :]


# ------------------------------------------------------------------- main ----

if __name__ == "__main__":
  B, num_joints, in_features, num_classes = 8, 256, 64, 10

  key = jax.random.PRNGKey(0)
  k_x, k_p = jax.random.split(key)
  x = jax.random.normal(k_x, (B, in_features, num_joints), jnp.float32)
  params = init_params(k_p, num_joints, in_features, num_classes)

  out = gcn_forward(x, params)
  out = jax.block_until_ready(out)

  ref = jax.block_until_ready(gcn_reference(x, params))
  assert out.shape == (B, num_classes)
  assert np.all(np.isfinite(np.asarray(out)))
  np.testing.assert_allclose(np.asarray(out), np.asarray(ref), rtol=5e-2, atol=5e-2)

  print("KERNEL_OK")
</pallas_src>

<mosaic_0001>
module attributes {stable_mosaic.version = 11 : i64} {
  func.func @kernel(%arg0: i32, %arg1: memref<64x1024xf32, #tpu.memory_space<vmem>>, %arg2: memref<1024x128xf32, #tpu.memory_space<vmem>>, %arg3: memref<128x64xf32, #tpu.memory_space<vmem>>, %arg4: memref<64x32xf32, #tpu.memory_space<vmem>>, %arg5: memref<32x4xf32, #tpu.memory_space<vmem>>, %arg6: memref<3x66x64xf32, #tpu.memory_space<vmem>>, %arg7: memref<2x128x128xf32, #tpu.memory_space<vmem>>, %arg8: memref<2x64x64xf32, #tpu.memory_space<vmem>>, %arg9: memref<2x32x32xf32, #tpu.memory_space<vmem>>, %arg10: memref<66x6xf32, #tpu.memory_space<vmem>>, %arg11: memref<1x512xf32, #tpu.memory_space<vmem>>, %arg12: memref<64x128xf32, #tpu.memory_space<vmem>>, %arg13: memref<1x4x128xf32, #tpu.memory_space<vmem>>) attributes {dimension_semantics = [#tpu.dimension_semantics<parallel>], iteration_bounds = array<i64: 2>, scalar_prefetch = 0 : i64, scratch_operands = 0 : i64, tpu.core_type = #tpu.core_type<tc>, window_params = [{transform_indices = @transform_0, window_bounds = array<i64: 64, 1024>}, {pipeline_mode = #tpu.pipeline_mode<synchronous>, transform_indices = @transform_1, window_bounds = array<i64: 1024, 128>}, {pipeline_mode = #tpu.pipeline_mode<synchronous>, transform_indices = @transform_2, window_bounds = array<i64: 128, 64>}, {pipeline_mode = #tpu.pipeline_mode<synchronous>, transform_indices = @transform_3, window_bounds = array<i64: 64, 32>}, {pipeline_mode = #tpu.pipeline_mode<synchronous>, transform_indices = @transform_4, window_bounds = array<i64: 32, 4>}, {pipeline_mode = #tpu.pipeline_mode<synchronous>, transform_indices = @transform_5, window_bounds = array<i64: 3, 66, 64>}, {pipeline_mode = #tpu.pipeline_mode<synchronous>, transform_indices = @transform_6, window_bounds = array<i64: 2, 128, 128>}, {pipeline_mode = #tpu.pipeline_mode<synchronous>, transform_indices = @transform_7, window_bounds = array<i64: 2, 64, 64>}, {pipeline_mode = #tpu.pipeline_mode<synchronous>, transform_indices = @transform_8, window_bounds = array<i64: 2, 32, 32>}, {pipeline_mode = #tpu.pipeline_mode<synchronous>, transform_indices = @transform_9, window_bounds = array<i64: 66, 6>}, {pipeline_mode = #tpu.pipeline_mode<synchronous>, transform_indices = @transform_10, window_bounds = array<i64: 1, 512>}, {pipeline_mode = #tpu.pipeline_mode<synchronous>, transform_indices = @transform_11, window_bounds = array<i64: 64, 128>}, {transform_indices = @transform_12, window_bounds = array<i64: 1, 4, 128>}]} {
    %c0 = arith.constant 0 : index
    %c0_0 = arith.constant 0 : index
    %0 = vector.load %arg1[%c0, %c0_0] : memref<64x1024xf32, #tpu.memory_space<vmem>>, vector<64x1024xf32>
    %c0_1 = arith.constant 0 : index
    %c0_2 = arith.constant 0 : index
    %1 = vector.load %arg2[%c0_1, %c0_2] : memref<1024x128xf32, #tpu.memory_space<vmem>>, vector<1024x128xf32>
    %c0_3 = arith.constant 0 : index
    %c0_4 = arith.constant 0 : index
    %2 = vector.load %arg11[%c0_3, %c0_4] : memref<1x512xf32, #tpu.memory_space<vmem>>, vector<1x128xf32>
    %cst = arith.constant dense<0.000000e+00> : vector<64x128xf32>
    %3 = tpu.matmul %0, %1, %cst {dimension_numbers = #tpu.dot_dimension_numbers<[1], [0], [0], [1], [0, 0, 1, 1], [], []>} : vector<64x1024xf32>, vector<1024x128xf32>, vector<64x128xf32> -> vector<64x128xf32>
    %4 = vector.broadcast %2 : vector<1x128xf32> to vector<64x128xf32>
    %5 = arith.addf %3, %4 : vector<64x128xf32>
    %c0_5 = arith.constant 0 : index
    %c0_6 = arith.constant 0 : index
    %c0_7 = arith.constant 0 : index
    %6 = vector.load %arg6[%c0_5, %c0_6, %c0_7] : memref<3x66x64xf32, #tpu.memory_space<vmem>>, vector<1x66x64xf32>
    %7 = vector.shape_cast %6 : vector<1x66x64xf32> to vector<66x64xf32>
    %cst_8 = arith.constant dense<0.000000e+00> : vector<66x128xf32>
    %8 = tpu.matmul %7, %5, %cst_8 {dimension_numbers = #tpu.dot_dimension_numbers<[1], [0], [0], [1], [0, 0, 1, 1], [], []>} : vector<66x64xf32>, vector<64x128xf32>, vector<66x128xf32> -> vector<66x128xf32>
    %c0_9 = arith.constant 0 : index
    %c0_10 = arith.constant 0 : index
    %9 = vector.load %arg10[%c0_9, %c0_10] : memref<66x6xf32, #tpu.memory_space<vmem>>, vector<66x1xf32>
    %10 = vector.broadcast %9 : vector<66x1xf32> to vector<66x128xf32>
    %11 = arith.addf %8, %10 : vector<66x128xf32>
    %12 = vector.extract_strided_slice %11 {offsets = [64, 0], sizes = [1, 128], strides = [1, 1]} : vector<66x128xf32> to vector<1x128xf32>
    %13 = vector.extract_strided_slice %11 {offsets = [65, 0], sizes = [1, 128], strides = [1, 1]} : vector<66x128xf32> to vector<1x128xf32>
    %c0_11 = arith.constant 0 : index
    %c0_12 = arith.constant 0 : index
    %c0_13 = arith.constant 0 : index
    %14 = vector.load %arg7[%c0_11, %c0_12, %c0_13] : memref<2x128x128xf32, #tpu.memory_space<vmem>>, vector<1x128x128xf32>
    %15 = vector.shape_cast %14 : vector<1x128x128xf32> to vector<128x128xf32>
    %16 = tpu.transpose %12, [1, 0] : vector<1x128xf32> -> vector<128x1xf32>
    %17 = vector.broadcast %16 : vector<128x1xf32> to vector<128x128xf32>
    %18 = vector.broadcast %13 : vector<1x128xf32> to vector<128x128xf32>
    %19 = arith.subf %17, %18 : vector<128x128xf32>
    %20 = math.tanh %19 : vector<128x128xf32>
    %c1 = arith.constant 1 : index
    %c0_14 = arith.constant 0 : index
    %c0_15 = arith.constant 0 : index
    %21 = vector.load %arg7[%c1, %c0_14, %c0_15] : memref<2x128x128xf32, #tpu.memory_space<vmem>>, vector<1x128x128xf32>
    %22 = vector.shape_cast %21 : vector<1x128x128xf32> to vector<128x128xf32>
    %23 = arith.mulf %20, %22 : vector<128x128xf32>
    %24 = arith.addf %15, %23 : vector<128x128xf32>
    %c0_16 = arith.constant 0 : index
    %c3 = arith.constant 3 : index
    %25 = vector.load %arg10[%c0_16, %c3] : memref<66x6xf32, #tpu.memory_space<vmem>>, vector<64x1xf32>
    %26 = vector.extract_strided_slice %11 {offsets = [0, 0], sizes = [64, 128], strides = [1, 1]} : vector<66x128xf32> to vector<64x128xf32>
    %cst_17 = arith.constant dense<0.000000e+00> : vector<64x128xf32>
    %27 = tpu.matmul %26, %24, %cst_17 {dimension_numbers = #tpu.dot_dimension_numbers<[1], [0], [0], [1], [0, 0, 1, 1], [], []>} : vector<64x128xf32>, vector<128x128xf32>, vector<64x128xf32> -> vector<64x128xf32>
    %28 = vector.broadcast %25 : vector<64x1xf32> to vector<64x128xf32>
    %29 = arith.addf %27, %28 : vector<64x128xf32>
    %c0_18 = arith.constant 0 : index
    %c0_19 = arith.constant 0 : index
    %30 = vector.load %arg3[%c0_18, %c0_19] : memref<128x64xf32, #tpu.memory_space<vmem>>, vector<128x64xf32>
    %c0_20 = arith.constant 0 : index
    %c128 = arith.constant 128 : index
    %31 = vector.load %arg11[%c0_20, %c128] : memref<1x512xf32, #tpu.memory_space<vmem>>, vector<1x64xf32>
    %cst_21 = arith.constant dense<0.000000e+00> : vector<64x64xf32>
    %32 = tpu.matmul %29, %30, %cst_21 {dimension_numbers = #tpu.dot_dimension_numbers<[1], [0], [0], [1], [0, 0, 1, 1], [], []>} : vector<64x128xf32>, vector<128x64xf32>, vector<64x64xf32> -> vector<64x64xf32>
    %33 = vector.broadcast %31 : vector<1x64xf32> to vector<64x64xf32>
    %34 = arith.addf %32, %33 : vector<64x64xf32>
    %c1_22 = arith.constant 1 : index
    %c0_23 = arith.constant 0 : index
    %c0_24 = arith.constant 0 : index
    %35 = vector.load %arg6[%c1_22, %c0_23, %c0_24] : memref<3x66x64xf32, #tpu.memory_space<vmem>>, vector<1x66x64xf32>
    %36 = vector.shape_cast %35 : vector<1x66x64xf32> to vector<66x64xf32>
    %cst_25 = arith.constant dense<0.000000e+00> : vector<66x64xf32>
    %37 = tpu.matmul %36, %34, %cst_25 {dimension_numbers = #tpu.dot_dimension_numbers<[1], [0], [0], [1], [0, 0, 1, 1], [], []>} : vector<66x64xf32>, vector<64x64xf32>, vector<66x64xf32> -> vector<66x64xf32>
    %c0_26 = arith.constant 0 : index
    %c1_27 = arith.constant 1 : index
    %38 = vector.load %arg10[%c0_26, %c1_27] : memref<66x6xf32, #tpu.memory_space<vmem>>, vector<66x1xf32>
    %39 = vector.broadcast %38 : vector<66x1xf32> to vector<66x64xf32>
    %40 = arith.addf %37, %39 : vector<66x64xf32>
    %41 = vector.extract_strided_slice %40 {offsets = [64, 0], sizes = [1, 64], strides = [1, 1]} : vector<66x64xf32> to vector<1x64xf32>
    %42 = vector.extract_strided_slice %40 {offsets = [65, 0], sizes = [1, 64], strides = [1, 1]} : vector<66x64xf32> to vector<1x64xf32>
    %c0_28 = arith.constant 0 : index
    %c0_29 = arith.constant 0 : index
    %c0_30 = arith.constant 0 : index
    %43 = vector.load %arg8[%c0_28, %c0_29, %c0_30] : memref<2x64x64xf32, #tpu.memory_space<vmem>>, vector<1x64x64xf32>
    %44 = vector.shape_cast %43 : vector<1x64x64xf32> to vector<64x64xf32>
    %45 = tpu.transpose %41, [1, 0] : vector<1x64xf32> -> vector<64x1xf32>
    %46 = vector.broadcast %45 : vector<64x1xf32> to vector<64x64xf32>
    %47 = vector.broadcast %42 : vector<1x64xf32> to vector<64x64xf32>
    %48 = arith.subf %46, %47 : vector<64x64xf32>
    %49 = math.tanh %48 : vector<64x64xf32>
    %c1_31 = arith.constant 1 : index
    %c0_32 = arith.constant 0 : index
    %c0_33 = arith.constant 0 : index
    %50 = vector.load %arg8[%c1_31, %c0_32, %c0_33] : memref<2x64x64xf32, #tpu.memory_space<vmem>>, vector<1x64x64xf32>
    %51 = vector.shape_cast %50 : vector<1x64x64xf32> to vector<64x64xf32>
    %52 = arith.mulf %49, %51 : vector<64x64xf32>
    %53 = arith.addf %44, %52 : vector<64x64xf32>
    %c0_34 = arith.constant 0 : index
    %c4 = arith.constant 4 : index
    %54 = vector.load %arg10[%c0_34, %c4] : memref<66x6xf32, #tpu.memory_space<vmem>>, vector<64x1xf32>
    %55 = vector.extract_strided_slice %40 {offsets = [0, 0], sizes = [64, 64], strides = [1, 1]} : vector<66x64xf32> to vector<64x64xf32>
    %cst_35 = arith.constant dense<0.000000e+00> : vector<64x64xf32>
    %56 = tpu.matmul %55, %53, %cst_35 {dimension_numbers = #tpu.dot_dimension_numbers<[1], [0], [0], [1], [0, 0, 1, 1], [], []>} : vector<64x64xf32>, vector<64x64xf32>, vector<64x64xf32> -> vector<64x64xf32>
    %57 = vector.broadcast %54 : vector<64x1xf32> to vector<64x64xf32>
    %58 = arith.addf %56, %57 : vector<64x64xf32>
    %c0_36 = arith.constant 0 : index
    %c0_37 = arith.constant 0 : index
    %59 = vector.load %arg4[%c0_36, %c0_37] : memref<64x32xf32, #tpu.memory_space<vmem>>, vector<64x32xf32>
    %c0_38 = arith.constant 0 : index
    %c256 = arith.constant 256 : index
    %60 = vector.load %arg11[%c0_38, %c256] : memref<1x512xf32, #tpu.memory_space<vmem>>, vector<1x32xf32>
    %cst_39 = arith.constant dense<0.000000e+00> : vector<64x32xf32>
    %61 = tpu.matmul %58, %59, %cst_39 {dimension_numbers = #tpu.dot_dimension_numbers<[1], [0], [0], [1], [0, 0, 1, 1], [], []>} : vector<64x64xf32>, vector<64x32xf32>, vector<64x32xf32> -> vector<64x32xf32>
    %62 = vector.broadcast %60 : vector<1x32xf32> to vector<64x32xf32>
    %63 = arith.addf %61, %62 : vector<64x32xf32>
    %c2 = arith.constant 2 : index
    %c0_40 = arith.constant 0 : index
    %c0_41 = arith.constant 0 : index
    %64 = vector.load %arg6[%c2, %c0_40, %c0_41] : memref<3x66x64xf32, #tpu.memory_space<vmem>>, vector<1x66x64xf32>
    %65 = vector.shape_cast %64 : vector<1x66x64xf32> to vector<66x64xf32>
    %cst_42 = arith.constant dense<0.000000e+00> : vector<66x32xf32>
    %66 = tpu.matmul %65, %63, %cst_42 {dimension_numbers = #tpu.dot_dimension_numbers<[1], [0], [0], [1], [0, 0, 1, 1], [], []>} : vector<66x64xf32>, vector<64x32xf32>, vector<66x32xf32> -> vector<66x32xf32>
    %c0_43 = arith.constant 0 : index
    %c2_44 = arith.constant 2 : index
    %67 = vector.load %arg10[%c0_43, %c2_44] : memref<66x6xf32, #tpu.memory_space<vmem>>, vector<66x1xf32>
    %68 = vector.broadcast %67 : vector<66x1xf32> to vector<66x32xf32>
    %69 = arith.addf %66, %68 : vector<66x32xf32>
    %70 = vector.extract_strided_slice %69 {offsets = [64, 0], sizes = [1, 32], strides = [1, 1]} : vector<66x32xf32> to vector<1x32xf32>
    %71 = vector.extract_strided_slice %69 {offsets = [65, 0], sizes = [1, 32], strides = [1, 1]} : vector<66x32xf32> to vector<1x32xf32>
    %c0_45 = arith.constant 0 : index
    %c0_46 = arith.constant 0 : index
    %c0_47 = arith.constant 0 : index
    %72 = vector.load %arg9[%c0_45, %c0_46, %c0_47] : memref<2x32x32xf32, #tpu.memory_space<vmem>>, vector<1x32x32xf32>
    %73 = vector.shape_cast %72 : vector<1x32x32xf32> to vector<32x32xf32>
    %74 = tpu.transpose %70, [1, 0] : vector<1x32xf32> -> vector<32x1xf32>
    %75 = vector.broadcast %74 : vector<32x1xf32> to vector<32x32xf32>
    %76 = vector.broadcast %71 : vector<1x32xf32> to vector<32x32xf32>
    %77 = arith.subf %75, %76 : vector<32x32xf32>
    %78 = math.tanh %77 : vector<32x32xf32>
    %c1_48 = arith.constant 1 : index
    %c0_49 = arith.constant 0 : index
    %c0_50 = arith.constant 0 : index
    %79 = vector.load %arg9[%c1_48, %c0_49, %c0_50] : memref<2x32x32xf32, #tpu.memory_space<vmem>>, vector<1x32x32xf32>
    %80 = vector.shape_cast %79 : vector<1x32x32xf32> to vector<32x32xf32>
    %81 = arith.mulf %78, %80 : vector<32x32xf32>
    %82 = arith.addf %73, %81 : vector<32x32xf32>
    %c0_51 = arith.constant 0 : index
    %c5 = arith.constant 5 : index
    %83 = vector.load %arg10[%c0_51, %c5] : memref<66x6xf32, #tpu.memory_space<vmem>>, vector<64x1xf32>
    %84 = vector.extract_strided_slice %69 {offsets = [0, 0], sizes = [64, 32], strides = [1, 1]} : vector<66x32xf32> to vector<64x32xf32>
    %cst_52 = arith.constant dense<0.000000e+00> : vector<64x32xf32>
    %85 = tpu.matmul %84, %82, %cst_52 {dimension_numbers = #tpu.dot_dimension_numbers<[1], [0], [0], [1], [0, 0, 1, 1], [], []>} : vector<64x32xf32>, vector<32x32xf32>, vector<64x32xf32> -> vector<64x32xf32>
    %86 = vector.broadcast %83 : vector<64x1xf32> to vector<64x32xf32>
    %87 = arith.addf %85, %86 : vector<64x32xf32>
    %c0_53 = arith.constant 0 : index
    %c0_54 = arith.constant 0 : index
    %88 = vector.load %arg5[%c0_53, %c0_54] : memref<32x4xf32, #tpu.memory_space<vmem>>, vector<32x4xf32>
    %cst_55 = arith.constant dense<0.000000e+00> : vector<64x4xf32>
    %89 = tpu.matmul %87, %88, %cst_55 {dimension_numbers = #tpu.dot_dimension_numbers<[1], [0], [0], [1], [0, 0, 1, 1], [], []>} : vector<64x32xf32>, vector<32x4xf32>, vector<64x4xf32> -> vector<64x4xf32>
    %90 = tpu.transpose %89, [1, 0] : vector<64x4xf32> -> vector<4x64xf32>
    %c0_56 = arith.constant 0 : index
    %c0_57 = arith.constant 0 : index
    %91 = vector.load %arg12[%c0_56, %c0_57] : memref<64x128xf32, #tpu.memory_space<vmem>>, vector<64x128xf32>
    %cst_58 = arith.constant dense<0.000000e+00> : vector<4x128xf32>
    %92 = tpu.matmul %90, %91, %cst_58 {dimension_numbers = #tpu.dot_dimension_numbers<[1], [0], [0], [1], [0, 0, 1, 1], [], []>} : vector<4x64xf32>, vector<64x128xf32>, vector<4x128xf32> -> vector<4x128xf32>
    %c0_59 = arith.constant 0 : index
    %c384 = arith.constant 384 : index
    %93 = vector.load %arg11[%c0_59, %c384] : memref<1x512xf32, #tpu.memory_space<vmem>>, vector<1x128xf32>
    %94 = vector.broadcast %93 : vector<1x128xf32> to vector<4x128xf32>
    %95 = arith.addf %92, %94 : vector<4x128xf32>
    %c0_60 = arith.constant 0 : index
    %c0_61 = arith.constant 0 : index
    %c0_62 = arith.constant 0 : index
    %96 = vector.load %arg13[%c0_60, %c0_61, %c0_62] : memref<1x4x128xf32, #tpu.memory_space<vmem>>, vector<1x4x128xf32>
    %97 = vector.shape_cast %96 : vector<1x4x128xf32> to vector<4x128xf32>
    %98 = vector.shape_cast %95 : vector<4x128xf32> to vector<1x4x128xf32>
    tpu.vector_store %arg13[%c0_60, %c0_61, %c0_62], %98 {strides = array<i32>} : memref<1x4x128xf32, #tpu.memory_space<vmem>>, vector<1x4x128xf32>,
    return
  }
  func.func @transform_0(%arg0: i32) -> (i32, i32) {
    %c0_i32 = arith.constant 0 : i32
    %c0_i32_0 = arith.constant 0 : i32
    return %c0_i32, %arg0 : i32, i32
  }
  func.func @transform_1(%arg0: i32) -> (i32, i32) {
    %c0_i32 = arith.constant 0 : i32
    %c0_i32_0 = arith.constant 0 : i32
    %c0_i32_1 = arith.constant 0 : i32
    return %c0_i32, %c0_i32_0 : i32, i32
  }
  func.func @transform_2(%arg0: i32) -> (i32, i32) {
    %c0_i32 = arith.constant 0 : i32
    %c0_i32_0 = arith.constant 0 : i32
    %c0_i32_1 = arith.constant 0 : i32
    return %c0_i32, %c0_i32_0 : i32, i32
  }
  func.func @transform_3(%arg0: i32) -> (i32, i32) {
    %c0_i32 = arith.constant 0 : i32
    %c0_i32_0 = arith.constant 0 : i32
    %c0_i32_1 = arith.constant 0 : i32
    return %c0_i32, %c0_i32_0 : i32, i32
  }
  func.func @transform_4(%arg0: i32) -> (i32, i32) {
    %c0_i32 = arith.constant 0 : i32
    %c0_i32_0 = arith.constant 0 : i32
    %c0_i32_1 = arith.constant 0 : i32
    return %c0_i32, %c0_i32_0 : i32, i32
  }
  func.func @transform_5(%arg0: i32) -> (i32, i32, i32) {
    %c0_i32 = arith.constant 0 : i32
    %c0_i32_0 = arith.constant 0 : i32
    %c0_i32_1 = arith.constant 0 : i32
    %c0_i32_2 = arith.constant 0 : i32
    return %c0_i32, %c0_i32_0, %c0_i32_1 : i32, i32, i32
  }
  func.func @transform_6(%arg0: i32) -> (i32, i32, i32) {
    %c0_i32 = arith.constant 0 : i32
    %c0_i32_0 = arith.constant 0 : i32
    %c0_i32_1 = arith.constant 0 : i32
    %c0_i32_2 = arith.constant 0 : i32
    return %c0_i32, %c0_i32_0, %c0_i32_1 : i32, i32, i32
  }
  func.func @transform_7(%arg0: i32) -> (i32, i32, i32) {
    %c0_i32 = arith.constant 0 : i32
    %c0_i32_0 = arith.constant 0 : i32
    %c0_i32_1 = arith.constant 0 : i32
    %c0_i32_2 = arith.constant 0 : i32
    return %c0_i32, %c0_i32_0, %c0_i32_1 : i32, i32, i32
  }
  func.func @transform_8(%arg0: i32) -> (i32, i32, i32) {
    %c0_i32 = arith.constant 0 : i32
    %c0_i32_0 = arith.constant 0 : i32
    %c0_i32_1 = arith.constant 0 : i32
    %c0_i32_2 = arith.constant 0 : i32
    return %c0_i32, %c0_i32_0, %c0_i32_1 : i32, i32, i32
  }
  func.func @transform_9(%arg0: i32) -> (i32, i32) {
    %c0_i32 = arith.constant 0 : i32
    %c0_i32_0 = arith.constant 0 : i32
    %c0_i32_1 = arith.constant 0 : i32
    return %c0_i32, %c0_i32_0 : i32, i32
  }
  func.func @transform_10(%arg0: i32) -> (i32, i32) {
    %c0_i32 = arith.constant 0 : i32
    %c0_i32_0 = arith.constant 0 : i32
    %c0_i32_1 = arith.constant 0 : i32
    return %c0_i32, %c0_i32_0 : i32, i32
  }
  func.func @transform_11(%arg0: i32) -> (i32, i32) {
    %c0_i32 = arith.constant 0 : i32
    %c0_i32_0 = arith.constant 0 : i32
    %c0_i32_1 = arith.constant 0 : i32
    return %c0_i32, %c0_i32_0 : i32, i32
  }
  func.func @transform_12(%arg0: i32) -> (i32, i32, i32) {
    %c0_i32 = arith.constant 0 : i32
    %c0_i32_0 = arith.constant 0 : i32
    %c0_i32_1 = arith.constant 0 : i32
    return %arg0, %c0_i32, %c0_i32_0 : i32, i32, i32
  }
}

</mosaic_0001>

<llo_original>
// kernel: mul.129
$region0: #{mul.129}
  #allocation0 [shape = 's32[1]{0}', space=sflag, size = 0x4, scoped, tag = 'scoped memory for mul.129']
  %s0 = inlined_call_operand.vmem [shape: f32[64], index: 0, kind: input, shape index: {}]
  %s1 = inlined_call_operand.vmem [shape: f32[64], index: 1, kind: input, shape index: {}]
  %s2 = inlined_call_operand.vmem [shape: f32[64], index: 2, kind: output, shape index: {}]
  %v3 = vld [vmem:[%s0] sm:$0x1]
  %v4 = vld [vmem:[%s1] sm:$0x1]
  %5 = xla_tuple %v3, %v4
  %6 = xla_tuple %5
  %v7 = vmul.f32 %v3, %v4
  %8 = xla_tuple %v7
  %9 = vst [vmem:[%s2] sm:$0x1] %v7

// kernel: tile.18
$region0: #{tile.18}
  #allocation0 [shape = 's32[1]{0}', space=sflag, size = 0x4, scoped, tag = 'scoped memory for tile.18']
  %s0 = inlined_call_operand.vmem [shape: f32[32], index: 0, kind: input, shape index: {}]
  %s1 = inlined_call_operand.vmem [shape: f32[4,32], index: 1, kind: output, shape index: {}]
  // Predicated region
  $region2: #{tile.18} parent=0 // pred_check
    _
  $region3: #{tile.18} parent=0 // pred_check_branch
    %3 = sbr.rel (0) target = $region5
  $region4: #{tile.18} parent=0 // pred_region
    _
  $region5: #{tile.18} parent=0 // pred_fallthru
    _
  %v4 = vld [vmem:[%s0] ss:$0 sm:$0xff]
  %5 = vst [vmem:[%s1] sm:$0xf] %v4

// kernel: tile.19
$region0: #{tile.19}
  %s0 = inlined_call_operand.vmem [shape: f32[4,32], index: 0, kind: input, shape index: {}]
  %s1 = inlined_call_operand.vmem [shape: f32[1,128], index: 1, kind: output, shape index: {}]
  $region1: #{tile.19} parent=0
    #allocation0 [shape = 'u8[4096]{0}', space=vmem, size = 0x1000, scoped, tag = 'scoped mem for output reshape']
    #allocation1 [shape = 'u8[4096]{0}', space=vmem, size = 0x1000, scoped, tag = 'scoped mem for input reshape']
    %s3 = ssub.s32 16, 1
    %v4 = vld [vmem:[%s0] sm:%s3]
    %5 = vst [vmem:[#allocation1] sm:%s3] %v4
    %v6 = vld [vmem:[#allocation1] sm:$0x1]
    %vm7 = vcmask 261120
    %8 = vst.msk [vmem:[#allocation0] sm:$0x1] %vm7, %v6
    %s9 = scalar_lea.vmem [#allocation1], 3
    %v10 = vld [vmem:[%s9] sm:$0x1]
    %11 = vrot.lane.b32.xlu0 %v10, 96
    %v12 = vpop.permute.xlu0 %11
    %vm13 = vcmask 1048320
    %14 = vst.msk [vmem:[#allocation0] sm:$0x1] %vm13, %v12
    %s15 = scalar_lea.vmem [#allocation1], 2
    %v16 = vld [vmem:[%s15] sm:$0x1]
    %17 = vrot.lane.b32.xlu0 %v16, 64
    %v18 = vpop.permute.xlu0 %17
    %vm19 = vcmask 785920
    %20 = vst.msk [vmem:[#allocation0] sm:$0x1] %vm19, %v18
    %s21 = scalar_lea.vmem [#allocation1], 1
    %v22 = vld [vmem:[%s21] sm:$0x1]
    %23 = vrot.lane.b32.xlu0 %v22, 32
    %v24 = vpop.permute.xlu0 %23
    %vm25 = vcmask 523520
    %26 = vst.msk [vmem:[#allocation0] sm:$0x1] %vm25, %v24
    %s28 = ssub.s32 2, 1
    %v29 = vld [vmem:[#allocation0] sm:%s28]
    %s31 = ssub.s32 2, 1
    %32 = vst [vmem:[%s1] sm:%s31] %v29

// kernel: tile.23
$region0: #{tile.23}
  #allocation0 [shape = 's32[1]{0}', space=sflag, size = 0x4, scoped, tag = 'scoped memory for tile.23']
  %s0 = inlined_call_operand.vmem [shape: f32[16], index: 0, kind: input, shape index: {}]
  %s1 = inlined_call_operand.vmem [shape: f32[4,16], index: 1, kind: output, shape index: {}]
  // Predicated region
  $region2: #{tile.23} parent=0 // pred_check
    _
  $region3: #{tile.23} parent=0 // pred_check_branch
    %3 = sbr.rel (0) target = $region5
  $region4: #{tile.23} parent=0 // pred_region
    _
  $region5: #{tile.23} parent=0 // pred_fallthru
    _
  %v4 = vld [vmem:[%s0] ss:$0 sm:$0xff]
  %5 = vst [vmem:[%s1] sm:$0xf] %v4

// kernel: tile.24
$region0: #{tile.24}
  %s0 = inlined_call_operand.vmem [shape: f32[4,16], index: 0, kind: input, shape index: {}]
  %s1 = inlined_call_operand.vmem [shape: f32[1,64], index: 1, kind: output, shape index: {}]
  $region1: #{tile.24} parent=0
    #allocation0 [shape = 'u8[4096]{0}', space=vmem, size = 0x1000, scoped, tag = 'scoped mem for output reshape']
    #allocation1 [shape = 'u8[4096]{0}', space=vmem, size = 0x1000, scoped, tag = 'scoped mem for input reshape']
    %s3 = ssub.s32 16, 1
    %v4 = vld [vmem:[%s0] sm:%s3]
    %5 = vst [vmem:[#allocation1] sm:%s3] %v4
    %v6 = vld [vmem:[#allocation1] sm:$0x1]
    %vm7 = vcmask 130048
    %8 = vst.msk [vmem:[#allocation0] sm:$0x1] %vm7, %v6
    %s9 = scalar_lea.vmem [#allocation1], 3
    %v10 = vld [vmem:[%s9] sm:$0x1]
    %11 = vrot.lane.b32.xlu0 %v10, 48
    %v12 = vpop.permute.xlu0 %11
    %vm13 = vcmask 523648
    %14 = vst.msk [vmem:[#allocation0] sm:$0x1] %vm13, %v12
    %s15 = scalar_lea.vmem [#allocation1], 2
    %v16 = vld [vmem:[%s15] sm:$0x1]
    %17 = vrot.lane.b32.xlu0 %v16, 32
    %v18 = vpop.permute.xlu0 %17
    %vm19 = vcmask 392448
    %20 = vst.msk [vmem:[#allocation0] sm:$0x1] %vm19, %v18
    %s21 = scalar_lea.vmem [#allocation1], 1
    %v22 = vld [vmem:[%s21] sm:$0x1]
    %23 = vrot.lane.b32.xlu0 %v22, 16
    %v24 = vpop.permute.xlu0 %23
    %vm25 = vcmask 261248
    %26 = vst.msk [vmem:[#allocation0] sm:$0x1] %vm25, %v24
    %s28 = ssub.s32 2, 1
    %v29 = vld [vmem:[#allocation0] sm:%s28]
    %s31 = ssub.s32 2, 1
    %32 = vst [vmem:[%s1] sm:%s31] %v29

// kernel: tile.28
$region0: #{tile.28}
  #allocation0 [shape = 's32[1]{0}', space=sflag, size = 0x4, scoped, tag = 'scoped memory for tile.28']
  %s0 = inlined_call_operand.vmem [shape: f32[8], index: 0, kind: input, shape index: {}]
  %s1 = inlined_call_operand.vmem [shape: f32[4,8], index: 1, kind: output, shape index: {}]
  // Predicated region
  $region2: #{tile.28} parent=0 // pred_check
    _
  $region3: #{tile.28} parent=0 // pred_check_branch
    %3 = sbr.rel (0) target = $region5
  $region4: #{tile.28} parent=0 // pred_region
    _
  $region5: #{tile.28} parent=0 // pred_fallthru
    _
  %v4 = vld [vmem:[%s0] ss:$0 sm:$0xff]
  %5 = vst [vmem:[%s1] sm:$0xf] %v4

// kernel: tile.29
$region0: #{tile.29}
  %s0 = inlined_call_operand.vmem [shape: f32[4,8], index: 0, kind: input, shape index: {}]
  %s1 = inlined_call_operand.vmem [shape: f32[1,32], index: 1, kind: output, shape index: {}]
  $region1: #{tile.29} parent=0
    #allocation0 [shape = 'u8[4096]{0}', space=vmem, size = 0x1000, scoped, tag = 'scoped mem for output reshape']
    #allocation1 [shape = 'u8[4096]{0}', space=vmem, size = 0x1000, scoped, tag = 'scoped mem for input reshape']
    %s3 = ssub.s32 16, 1
    %v4 = vld [vmem:[%s0] sm:%s3]
    %5 = vst [vmem:[#allocation1] sm:%s3] %v4
    %v6 = vld [vmem:[#allocation1] sm:$0x1]
    %vm7 = vcmask 64512
    %8 = vst.msk [vmem:[#allocation0] sm:$0x1] %vm7, %v6
    %s9 = scalar_lea.vmem [#allocation1], 3
    %v10 = vld [vmem:[%s9] sm:$0x1]
    %11 = vrot.lane.b32.xlu0 %v10, 24
    %v12 = vpop.permute.xlu0 %11
    %vm13 = vcmask 261312
    %14 = vst.msk [vmem:[#allocation0] sm:$0x1] %vm13, %v12
    %s15 = scalar_lea.vmem [#allocation1], 2
    %v16 = vld [vmem:[%s15] sm:$0x1]
    %17 = vrot.lane.b32.xlu0 %v16, 16
    %v18 = vpop.permute.xlu0 %17
    %vm19 = vcmask 195712
    %20 = vst.msk [vmem:[#allocation0] sm:$0x1] %vm19, %v18
    %s21 = scalar_lea.vmem [#allocation1], 1
    %v22 = vld [vmem:[%s21] sm:$0x1]
    %23 = vrot.lane.b32.xlu0 %v22, 8
    %v24 = vpop.permute.xlu0 %23
    %vm25 = vcmask 130112
    %26 = vst.msk [vmem:[#allocation0] sm:$0x1] %vm25, %v24
    %s28 = ssub.s32 2, 1
    %v29 = vld [vmem:[#allocation0] sm:%s28]
    %s31 = ssub.s32 2, 1
    %32 = vst [vmem:[%s1] sm:%s31] %v29

// kernel: gcn_forward.1
$region0: #{gcn_forward.1}
  #allocation0 [shape = 'u32[]', space=smem, size = 0x4, offset = 0x4, fixed_abs, tag = 'smem constant byte address 0x4 - core index']
  #allocation1 [shape = 'u32[72,128]{1,0:T(1,128)}', space=vmem, size = 0x9000, scoped, tag = 'internal scratch']
  %s0 = inlined_call_operand.vmem [shape: f32[64,2048], index: 0, kind: input, shape index: {}]
  %s1 = inlined_call_operand.vmem [shape: f32[1024,128], index: 1, kind: input, shape index: {}]
  %s2 = inlined_call_operand.vmem [shape: f32[128,64], index: 2, kind: input, shape index: {}]
  %s3 = inlined_call_operand.vmem [shape: f32[64,32], index: 3, kind: input, shape index: {}]
  %s4 = inlined_call_operand.vmem [shape: f32[32,4], index: 4, kind: input, shape index: {}]
  %s5 = inlined_call_operand.vmem [shape: f32[3,66,64], index: 5, kind: input, shape index: {}]
  %s6 = inlined_call_operand.vmem [shape: f32[2,128,128], index: 6, kind: input, shape index: {}]
  %s7 = inlined_call_operand.vmem [shape: f32[2,64,64], index: 7, kind: input, shape index: {}]
  %s8 = inlined_call_operand.vmem [shape: f32[2,32,32], index: 8, kind: input, shape index: {}]
  %s9 = inlined_call_operand.vmem [shape: f32[66,6], index: 9, kind: input, shape index: {}]
  %s10 = inlined_call_operand.vmem [shape: f32[1,512], index: 10, kind: input, shape index: {}]
  %s11 = inlined_call_operand.vmem [shape: f32[64,128], index: 11, kind: input, shape index: {}]
  %s12 = inlined_call_operand.hbm [shape: f32[2,4,128], index: 12, kind: output, shape index: {}]
  %s13 = sld [smem:[#allocation0]]
  $region104: #{gcn_forward.1} parent=0
    _
  %s15 = ssub.s32 1, %s13
  %s16 = scalar_select 0, %s15, %s13
  $region1: #{gcn_forward.1} parent=0
    #allocation2 [shape = 'u8[524288]{0}', space=vmem, size = 0x80000, scoped, tag = 'input window, operand 0']
    #allocation3 [shape = 'u8[4096]{0}', space=vmem, size = 0x1000, scoped, tag = 'output window, operand 0']
    #allocation4 [shape = 's32[2]{0}', space=sflag, size = 0x8, scoped, tag = 'scoped memory for gcn_forward.1']
    %17 = vsyncpa [#allocation4], 0
    %s18 = scalar_lea.sflag [#allocation4], 1
    %19 = vsyncpa %s18, 0
    loop: start=0, step=1, limit=4
    $region2: #{gcn_forward.1} parent=1 // loop_pre_header
      _
    $region3: #{gcn_forward.1} parent=1 // loop_header
      %s21 = sphi 0, %s25
      %p22 = scmp.ge.s32.totalorder %s21, 4
      %s31 = sphi 0, %s33
      %s34 = sphi 0, %s31
      %s35 = sphi 0, %s34
      %s51 = sphi 0, %s35
      %s55 = sphi 0, %s55
      %s57 = sphi 0, %s55
      %s58 = sphi 0, %s57
      %s72 = sphi 0, %s58
      %s76 = sphi 0, %s76
      %s78 = sphi 0, %s76
      %s79 = sphi 0, %s78
      %s93 = sphi 0, %s79
      %s97 = sphi 0, %s97
      %s99 = sphi 0, %s97
      %s100 = sphi 0, %s99
      %s114 = sphi 0, %s100
      %s118 = sphi 0, %s118
      %s120 = sphi 0, %s118
      %s121 = sphi 0, %s120
      %s135 = sphi 0, %s121
      %s139 = sphi 0, %s139
      %s141 = sphi 0, %s139
      %s142 = sphi 0, %s141
      %s156 = sphi 0, %s142
      %s160 = sphi 0, %s160
      %s162 = sphi 0, %s160
      %s163 = sphi 0, %s162
      %s177 = sphi 0, %s163
      %s181 = sphi 0, %s181
      %s183 = sphi 0, %s181
      %s184 = sphi 0, %s183
      %s198 = sphi 0, %s184
      %s202 = sphi 0, %s202
      %s204 = sphi 0, %s202
      %s205 = sphi 0, %s204
      %s219 = sphi 0, %s205
      %s223 = sphi 0, %s223
      %s225 = sphi 0, %s223
      %s226 = sphi 0, %s225
      %s240 = sphi 0, %s226
      %s244 = sphi 0, %s244
      %s246 = sphi 0, %s244
      %s247 = sphi 0, %s246
      %s261 = sphi 0, %s247
      %s265 = sphi 0, %s265
      %s267 = sphi 0, %s265
      %s268 = sphi 0, %s267
      %s282 = sphi 0, %s268
      %s288 = sphi 0, %s290
      %s291 = sphi 0, %s288
      %s292 = sphi 0, %s291
      %s308 = sphi 0, %s292
    $region4: #{gcn_forward.1} parent=1 // loop_header_branch
      %24 = sbr.rel (%p22) target = $region8
    $region5: #{gcn_forward.1} parent=1 // loop_body
      %s26 = ssub.s32 %s21, 1
      %s27 = ssub.s32 %s21, 2
      %s28 = sadd.s32 %s21, 1
      %s29 = ssub.s32 %s21, %s28
      %p30 = scmp.eq.s32.totalorder %s29, 0
      %s32 = sadd.s32 %s31, 1
      %s33 = scalar_select %p30, %s31, %s32
      %p36 = pneg %p30
      %p37 = scmp.eq.s32.totalorder %s21, 1
      %p38 = por %p36, %p37
      %p39 = scmp.ne.s32.totalorder %s31, %s34
      %p40 = scmp.eq.s32.totalorder %s21, 0
      %p41 = por %p39, %p40
      %p42 = scmp.ne.s32.totalorder %s31, %s34
      %p43 = scmp.eq.s32.totalorder %s26, 1
      %p44 = por %p42, %p43
      %p45 = scmp.ne.s32.totalorder %s34, %s35
      %p46 = scmp.eq.s32.totalorder %s26, 0
      %p47 = por %p45, %p46
      %p48 = scmp.ne.s32.totalorder %s34, %s35
      %p49 = scmp.eq.s32.totalorder %s27, 1
      %p50 = por %p48, %p49
      %p52 = scmp.ne.s32.totalorder %s35, %s51
      %p53 = scmp.eq.s32.totalorder %s27, 0
      %p54 = por %p52, %p53
      %s56 = sadd.s32 %s55, 1
      %p59 = scmp.eq.s32.totalorder %s21, 1
      %p60 = scmp.ne.s32.totalorder %s55, %s57
      %p61 = scmp.eq.s32.totalorder %s21, 0
      %p62 = por %p60, %p61
      %p63 = scmp.ne.s32.totalorder %s55, %s57
      %p64 = scmp.eq.s32.totalorder %s26, 1
      %p65 = por %p63, %p64
      %p66 = scmp.ne.s32.totalorder %s57, %s58
      %p67 = scmp.eq.s32.totalorder %s26, 0
      %p68 = por %p66, %p67
      %p69 = scmp.ne.s32.totalorder %s57, %s58
      %p70 = scmp.eq.s32.totalorder %s27, 1
      %p71 = por %p69, %p70
      %p73 = scmp.ne.s32.totalorder %s58, %s72
      %p74 = scmp.eq.s32.totalorder %s27, 0
      %p75 = por %p73, %p74
      %s77 = sadd.s32 %s76, 1
      %p80 = scmp.eq.s32.totalorder %s21, 1
      %p81 = scmp.ne.s32.totalorder %s76, %s78
      %p82 = scmp.eq.s32.totalorder %s21, 0
      %p83 = por %p81, %p82
      %p84 = scmp.ne.s32.totalorder %s76, %s78
      %p85 = scmp.eq.s32.totalorder %s26, 1
      %p86 = por %p84, %p85
      %p87 = scmp.ne.s32.totalorder %s78, %s79
      %p88 = scmp.eq.s32.totalorder %s26, 0
      %p89 = por %p87, %p88
      %p90 = scmp.ne.s32.totalorder %s78, %s79
      %p91 = scmp.eq.s32.totalorder %s27, 1
      %p92 = por %p90, %p91
      %p94 = scmp.ne.s32.totalorder %s79, %s93
      %p95 = scmp.eq.s32.totalorder %s27, 0
      %p96 = por %p94, %p95
      %s98 = sadd.s32 %s97, 1
      %p101 = scmp.eq.s32.totalorder %s21, 1
      %p102 = scmp.ne.s32.totalorder %s97, %s99
      %p103 = scmp.eq.s32.totalorder %s21, 0
      %p104 = por %p102, %p103
      %p105 = scmp.ne.s32.totalorder %s97, %s99
      %p106 = scmp.eq.s32.totalorder %s26, 1
      %p107 = por %p105, %p106
      %p108 = scmp.ne.s32.totalorder %s99, %s100
      %p109 = scmp.eq.s32.totalorder %s26, 0
      %p110 = por %p108, %p109
      %p111 = scmp.ne.s32.totalorder %s99, %s100
      %p112 = scmp.eq.s32.totalorder %s27, 1
      %p113 = por %p111, %p112
      %p115 = scmp.ne.s32.totalorder %s100, %s114
      %p116 = scmp.eq.s32.totalorder %s27, 0
      %p117 = por %p115, %p116
      %s119 = sadd.s32 %s118, 1
      %p122 = scmp.eq.s32.totalorder %s21, 1
      %p123 = scmp.ne.s32.totalorder %s118, %s120
      %p124 = scmp.eq.s32.totalorder %s21, 0
      %p125 = por %p123, %p124
      %p126 = scmp.ne.s32.totalorder %s118, %s120
      %p127 = scmp.eq.s32.totalorder %s26, 1
      %p128 = por %p126, %p127
      %p129 = scmp.ne.s32.totalorder %s120, %s121
      %p130 = scmp.eq.s32.totalorder %s26, 0
      %p131 = por %p129, %p130
      %p132 = scmp.ne.s32.totalorder %s120, %s121
      %p133 = scmp.eq.s32.totalorder %s27, 1
      %p134 = por %p132, %p133
      %p136 = scmp.ne.s32.totalorder %s121, %s135
      %p137 = scmp.eq.s32.totalorder %s27, 0
      %p138 = por %p136, %p137
      %s140 = sadd.s32 %s139, 1
      %p143 = scmp.eq.s32.totalorder %s21, 1
      %p144 = scmp.ne.s32.totalorder %s139, %s141
      %p145 = scmp.eq.s32.totalorder %s21, 0
      %p146 = por %p144, %p145
      %p147 = scmp.ne.s32.totalorder %s139, %s141
      %p148 = scmp.eq.s32.totalorder %s26, 1
      %p149 = por %p147, %p148
      %p150 = scmp.ne.s32.totalorder %s141, %s142
      %p151 = scmp.eq.s32.totalorder %s26, 0
      %p152 = por %p150, %p151
      %p153 = scmp.ne.s32.totalorder %s141, %s142
      %p154 = scmp.eq.s32.totalorder %s27, 1
      %p155 = por %p153, %p154
      %p157 = scmp.ne.s32.totalorder %s142, %s156
      %p158 = scmp.eq.s32.totalorder %s27, 0
      %p159 = por %p157, %p158
      %s161 = sadd.s32 %s160, 1
      %p164 = scmp.eq.s32.totalorder %s21, 1
      %p165 = scmp.ne.s32.totalorder %s160, %s162
      %p166 = scmp.eq.s32.totalorder %s21, 0
      %p167 = por %p165, %p166
      %p168 = scmp.ne.s32.totalorder %s160, %s162
      %p169 = scmp.eq.s32.totalorder %s26, 1
      %p170 = por %p168, %p169
      %p171 = scmp.ne.s32.totalorder %s162, %s163
      %p172 = scmp.eq.s32.totalorder %s26, 0
      %p173 = por %p171, %p172
      %p174 = scmp.ne.s32.totalorder %s162, %s163
      %p175 = scmp.eq.s32.totalorder %s27, 1
      %p176 = por %p174, %p175
      %p178 = scmp.ne.s32.totalorder %s163, %s177
      %p179 = scmp.eq.s32.totalorder %s27, 0
      %p180 = por %p178, %p179
      %s182 = sadd.s32 %s181, 1
      %p185 = scmp.eq.s32.totalorder %s21, 1
      %p186 = scmp.ne.s32.totalorder %s181, %s183
      %p187 = scmp.eq.s32.totalorder %s21, 0
      %p188 = por %p186, %p187
      %p189 = scmp.ne.s32.totalorder %s181, %s183
      %p190 = scmp.eq.s32.totalorder %s26, 1
      %p191 = por %p189, %p190
      %p192 = scmp.ne.s32.totalorder %s183, %s184
      %p193 = scmp.eq.s32.totalorder %s26, 0
      %p194 = por %p192, %p193
      %p195 = scmp.ne.s32.totalorder %s183, %s184
      %p196 = scmp.eq.s32.totalorder %s27, 1
      %p197 = por %p195, %p196
      %p199 = scmp.ne.s32.totalorder %s184, %s198
      %p200 = scmp.eq.s32.totalorder %s27, 0
      %p201 = por %p199, %p200
      %s203 = sadd.s32 %s202, 1
      %p206 = scmp.eq.s32.totalorder %s21, 1
      %p207 = scmp.ne.s32.totalorder %s202, %s204
      %p208 = scmp.eq.s32.totalorder %s21, 0
      %p209 = por %p207, %p208
      %p210 = scmp.ne.s32.totalorder %s202, %s204
      %p211 = scmp.eq.s32.totalorder %s26, 1
      %p212 = por %p210, %p211
      %p213 = scmp.ne.s32.totalorder %s204, %s205
      %p214 = scmp.eq.s32.totalorder %s26, 0
      %p215 = por %p213, %p214
      %p216 = scmp.ne.s32.totalorder %s204, %s205
      %p217 = scmp.eq.s32.totalorder %s27, 1
      %p218 = por %p216, %p217
      %p220 = scmp.ne.s32.totalorder %s205, %s219
      %p221 = scmp.eq.s32.totalorder %s27, 0
      %p222 = por %p220, %p221
      %s224 = sadd.s32 %s223, 1
      %p227 = scmp.eq.s32.totalorder %s21, 1
      %p228 = scmp.ne.s32.totalorder %s223, %s225
      %p229 = scmp.eq.s32.totalorder %s21, 0
      %p230 = por %p228, %p229
      %p231 = scmp.ne.s32.totalorder %s223, %s225
      %p232 = scmp.eq.s32.totalorder %s26, 1
      %p233 = por %p231, %p232
      %p234 = scmp.ne.s32.totalorder %s225, %s226
      %p235 = scmp.eq.s32.totalorder %s26, 0
      %p236 = por %p234, %p235
      %p237 = scmp.ne.s32.totalorder %s225, %s226
      %p238 = scmp.eq.s32.totalorder %s27, 1
      %p239 = por %p237, %p238
      %p241 = scmp.ne.s32.totalorder %s226, %s240
      %p242 = scmp.eq.s32.totalorder %s27, 0
      %p243 = por %p241, %p242
      %s245 = sadd.s32 %s244, 1
      %p248 = scmp.eq.s32.totalorder %s21, 1
      %p249 = scmp.ne.s32.totalorder %s244, %s246
      %p250 = scmp.eq.s32.totalorder %s21, 0
      %p251 = por %p249, %p250
      %p252 = scmp.ne.s32.totalorder %s244, %s246
      %p253 = scmp.eq.s32.totalorder %s26, 1
      %p254 = por %p252, %p253
      %p255 = scmp.ne.s32.totalorder %s246, %s247
      %p256 = scmp.eq.s32.totalorder %s26, 0
      %p257 = por %p255, %p256
      %p258 = scmp.ne.s32.totalorder %s246, %s247
      %p259 = scmp.eq.s32.totalorder %s27, 1
      %p260 = por %p258, %p259
      %p262 = scmp.ne.s32.totalorder %s247, %s261
      %p263 = scmp.eq.s32.totalorder %s27, 0
      %p264 = por %p262, %p263
      %s266 = sadd.s32 %s265, 1
      %p269 = scmp.eq.s32.totalorder %s21, 1
      %p270 = scmp.ne.s32.totalorder %s265, %s267
      %p271 = scmp.eq.s32.totalorder %s21, 0
      %p272 = por %p270, %p271
      %p273 = scmp.ne.s32.totalorder %s265, %s267
      %p274 = scmp.eq.s32.totalorder %s26, 1
      %p275 = por %p273, %p274
      %p276 = scmp.ne.s32.totalorder %s267, %s268
      %p277 = scmp.eq.s32.totalorder %s26, 0
      %p278 = por %p276, %p277
      %p279 = scmp.ne.s32.totalorder %s267, %s268
      %p280 = scmp.eq.s32.totalorder %s27, 1
      %p281 = por %p279, %p280
      %p283 = scmp.ne.s32.totalorder %s268, %s282
      %p284 = scmp.eq.s32.totalorder %s27, 0
      %p285 = por %p283, %p284
      %s286 = ssub.s32 %s21, %s28
      %p287 = scmp.eq.s32.totalorder %s286, 0
      %s289 = sadd.s32 %s288, 1
      %s290 = scalar_select %p287, %s288, %s289
      %p293 = pneg %p287
      %p294 = scmp.eq.s32.totalorder %s21, 1
      %p295 = por %p293, %p294
      %p296 = scmp.ne.s32.totalorder %s288, %s291
      %p297 = scmp.eq.s32.totalorder %s21, 0
      %p298 = por %p296, %p297
      %p299 = scmp.ne.s32.totalorder %s288, %s291
      %p300 = scmp.eq.s32.totalorder %s26, 1
      %p301 = por %p299, %p300
      %p302 = scmp.ne.s32.totalorder %s291, %s292
      %p303 = scmp.eq.s32.totalorder %s26, 0
      %p304 = por %p302, %p303
      %p305 = scmp.ne.s32.totalorder %s291, %s292
      %p306 = scmp.eq.s32.totalorder %s27, 1
      %p307 = por %p305, %p306
      %p309 = scmp.ne.s32.totalorder %s292, %s308
      %p310 = scmp.eq.s32.totalorder %s27, 0
      %p311 = por %p309, %p310
      %p312 = scmp.le.s32.totalorder 1, %s21
      %p313 = scmp.lt.s32.totalorder %s21, 3
      %p314 = pnand %p312, %p313
      %p315 = pneg %p314
      // Predicated region
      $region9: #{gcn_forward.1} parent=5 // pred_check
        _
      $region10: #{gcn_forward.1} parent=5 // pred_check_branch
        %317 = sbr.rel (%p314) target = $region12
      $region11: #{gcn_forward.1} parent=5 // pred_region
        %s318 = ssub.s32 %s21, 1
        // Predicated region
        $region13: #{gcn_forward.1} parent=11 // pred_check
          %p319 = pneg %p68
        $region14: #{gcn_forward.1} parent=11 // pred_check_branch
          %321 = sbr.rel (%p319) target = $region16
        $region15: #{gcn_forward.1} parent=11 // pred_region
          _
        $region16: #{gcn_forward.1} parent=11 // pred_fallthru
          _
        // Predicated region
        $region17: #{gcn_forward.1} parent=11 // pred_check
          %p322 = pneg %p89
        $region18: #{gcn_forward.1} parent=11 // pred_check_branch
          %324 = sbr.rel (%p322) target = $region20
        $region19: #{gcn_forward.1} parent=11 // pred_region
          _
        $region20: #{gcn_forward.1} parent=11 // pred_fallthru
          _
        // Predicated region
        $region21: #{gcn_forward.1} parent=11 // pred_check
          %p325 = pneg %p110
        $region22: #{gcn_forward.1} parent=11 // pred_check_branch
          %327 = sbr.rel (%p325) target = $region24
        $region23: #{gcn_forward.1} parent=11 // pred_region
          _
        $region24: #{gcn_forward.1} parent=11 // pred_fallthru
          _
        // Predicated region
        $region25: #{gcn_forward.1} parent=11 // pred_check
          %p328 = pneg %p131
        $region26: #{gcn_forward.1} parent=11 // pred_check_branch
          %330 = sbr.rel (%p328) target = $region28
        $region27: #{gcn_forward.1} parent=11 // pred_region
          _
        $region28: #{gcn_forward.1} parent=11 // pred_fallthru
          _
        // Predicated region
        $region29: #{gcn_forward.1} parent=11 // pred_check
          %p331 = pneg %p152
        $region30: #{gcn_forward.1} parent=11 // pred_check_branch
          %333 = sbr.rel (%p331) target = $region32
        $region31: #{gcn_forward.1} parent=11 // pred_region
          _
        $region32: #{gcn_forward.1} parent=11 // pred_fallthru
          _
        // Predicated region
        $region33: #{gcn_forward.1} parent=11 // pred_check
          %p334 = pneg %p173
        $region34: #{gcn_forward.1} parent=11 // pred_check_branch
          %336 = sbr.rel (%p334) target = $region36
        $region35: #{gcn_forward.1} parent=11 // pred_region
          _
        $region36: #{gcn_forward.1} parent=11 // pred_fallthru
          _
        // Predicated region
        $region37: #{gcn_forward.1} parent=11 // pred_check
          %p337 = pneg %p194
        $region38: #{gcn_forward.1} parent=11 // pred_check_branch
          %339 = sbr.rel (%p337) target = $region40
        $region39: #{gcn_forward.1} parent=11 // pred_region
          _
        $region40: #{gcn_forward.1} parent=11 // pred_fallthru
          _
        // Predicated region
        $region41: #{gcn_forward.1} parent=11 // pred_check
          %p340 = pneg %p215
        $region42: #{gcn_forward.1} parent=11 // pred_check_branch
          %342 = sbr.rel (%p340) target = $region44
        $region43: #{gcn_forward.1} parent=11 // pred_region
          _
        $region44: #{gcn_forward.1} parent=11 // pred_fallthru
          _
        // Predicated region
        $region45: #{gcn_forward.1} parent=11 // pred_check
          %p343 = pneg %p236
        $region46: #{gcn_forward.1} parent=11 // pred_check_branch
          %345 = sbr.rel (%p343) target = $region48
        $region47: #{gcn_forward.1} parent=11 // pred_region
          _
        $region48: #{gcn_forward.1} parent=11 // pred_fallthru
          _
        // Predicated region
        $region49: #{gcn_forward.1} parent=11 // pred_check
          %p346 = pneg %p257
        $region50: #{gcn_forward.1} parent=11 // pred_check_branch
          %348 = sbr.rel (%p346) target = $region52
        $region51: #{gcn_forward.1} parent=11 // pred_region
          _
        $region52: #{gcn_forward.1} parent=11 // pred_fallthru
          _
        // Predicated region
        $region53: #{gcn_forward.1} parent=11 // pred_check
          %p349 = pneg %p278
        $region54: #{gcn_forward.1} parent=11 // pred_check_branch
          %351 = sbr.rel (%p349) target = $region56
        $region55: #{gcn_forward.1} parent=11 // pred_region
          _
        $region56: #{gcn_forward.1} parent=11 // pred_fallthru
          _
      $region12: #{gcn_forward.1} parent=5 // pred_fallthru
        _
      %p352 = scmp.lt.s32.totalorder %s21, 2
      // Predicated region
      $region57: #{gcn_forward.1} parent=5 // pred_check
        %p353 = pneg %p352
      $region58: #{gcn_forward.1} parent=5 // pred_check_branch
        %355 = sbr.rel (%p353) target = $region60
      $region59: #{gcn_forward.1} parent=5 // pred_region
        // Predicated region
        $region61: #{gcn_forward.1} parent=59 // pred_check
          %p356 = pneg %p41
        $region62: #{gcn_forward.1} parent=59 // pred_check_branch
          %358 = sbr.rel (%p356) target = $region64
        $region63: #{gcn_forward.1} parent=59 // pred_region
          %s359 = sand.u32 %s31, 1
          %s360 = sand.u32 %s31, 1
          %s361 = smul.addr %s360, 512
          %s362 = scalar_lea.vmem [#allocation2], %s361
          %s363 = smul.u32 8, %s21
          %s364 = smul.addr %s363, 8
          %s365 = scalar_lea.vmem %s0, %s364
          // Predicated region
          $region65: #{gcn_forward.1} parent=63 // pred_check
            _
          $region66: #{gcn_forward.1} parent=63 // pred_check_branch
            %367 = sbr.rel (0) target = $region68
          $region67: #{gcn_forward.1} parent=63 // pred_region
            // Predicated region
            $region69: #{gcn_forward.1} parent=67 // pred_check
              _
            $region70: #{gcn_forward.1} parent=67 // pred_check_branch
              %369 = sbr.rel (0) target = $region72
            $region71: #{gcn_forward.1} parent=67 // pred_region
              loop: start=0, step=1, limit=1
              $region73: #{gcn_forward.1} parent=71 // loop_pre_header
                _
              $region74: #{gcn_forward.1} parent=71 // loop_header
                %s371 = sphi 0, %s375
                %p372 = scmp.ge.s32.totalorder %s371, 1
                %s376 = sphi %s365, %s365
                %s377 = sphi %s362, %s362
              $region75: #{gcn_forward.1} parent=71 // loop_header_branch
                %374 = sbr.rel (%p372) target = $region79
              $region76: #{gcn_forward.1} parent=71 // loop_body
                %v378 = vld [vmem:[%s376] sm:$0xff]
                %379 = vst [vmem:[%s377] sm:$0xff] %v378
                %v380 = vld [vmem:[%s376 + $0x8] sm:$0xff]
                %381 = vst [vmem:[%s377 + $0x8] sm:$0xff] %v380
                %v382 = vld [vmem:[%s376 + $0x10] sm:$0xff]
                %383 = vst [vmem:[%s377 + $0x10] sm:$0xff] %v382
                %v384 = vld [vmem:[%s376 + $0x18] sm:$0xff]
                %385 = vst [vmem:[%s377 + $0x18] sm:$0xff] %v384
                %v386 = vld [vmem:[%s376 + $0x20] sm:$0xff]
                %387 = vst [vmem:[%s377 + $0x20] sm:$0xff] %v386
                %v388 = vld [vmem:[%s376 + $0x28] sm:$0xff]
                %389 = vst [vmem:[%s377 + $0x28] sm:$0xff] %v388
                %v390 = vld [vmem:[%s376 + $0x30] sm:$0xff]
                %391 = vst [vmem:[%s377 + $0x30] sm:$0xff] %v390
                %v392 = vld [vmem:[%s376 + $0x38] sm:$0xff]
                %393 = vst [vmem:[%s377 + $0x38] sm:$0xff] %v392
                %v394 = vld [vmem:[%s376 + $0x80] sm:$0xff]
                %395 = vst [vmem:[%s377 + $0x40] sm:$0xff] %v394
                %v396 = vld [vmem:[%s376 + $0x88] sm:$0xff]
                %397 = vst [vmem:[%s377 + $0x48] sm:$0xff] %v396
                %v398 = vld [vmem:[%s376 + $0x90] sm:$0xff]
                %399 = vst [vmem:[%s377 + $0x50] sm:$0xff] %v398
                %v400 = vld [vmem:[%s376 + $0x98] sm:$0xff]
                %401 = vst [vmem:[%s377 + $0x58] sm:$0xff] %v400
                %v402 = vld [vmem:[%s376 + $0xa0] sm:$0xff]
                %403 = vst [vmem:[%s377 + $0x60] sm:$0xff] %v402
                %v404 = vld [vmem:[%s376 + $0xa8] sm:$0xff]
                %405 = vst [vmem:[%s377 + $0x68] sm:$0xff] %v404
                %v406 = vld [vmem:[%s376 + $0xb0] sm:$0xff]
                %407 = vst [vmem:[%s377 + $0x70] sm:$0xff] %v406
                %v408 = vld [vmem:[%s376 + $0xb8] sm:$0xff]
                %409 = vst [vmem:[%s377 + $0x78] sm:$0xff] %v408
                %v410 = vld [vmem:[%s376 + $0x100] sm:$0xff]
                %411 = vst [vmem:[%s377 + $0x80] sm:$0xff] %v410
                %v412 = vld [vmem:[%s376 + $0x108] sm:$0xff]
                %413 = vst [vmem:[%s377 + $0x88] sm:$0xff] %v412
                %v414 = vld [vmem:[%s376 + $0x110] sm:$0xff]
                %415 = vst [vmem:[%s377 + $0x90] sm:$0xff] %v414
                %v416 = vld [vmem:[%s376 + $0x118] sm:$0xff]
                %417 = vst [vmem:[%s377 + $0x98] sm:$0xff] %v416
                %v418 = vld [vmem:[%s376 + $0x120] sm:$0xff]
                %419 = vst [vmem:[%s377 + $0xa0] sm:$0xff] %v418
                %v420 = vld [vmem:[%s376 + $0x128] sm:$0xff]
                %421 = vst [vmem:[%s377 + $0xa8] sm:$0xff] %v420
                %v422 = vld [vmem:[%s376 + $0x130] sm:$0xff]
                %423 = vst [vmem:[%s377 + $0xb0] sm:$0xff] %v422
                %v424 = vld [vmem:[%s376 + $0x138] sm:$0xff]
                %425 = vst [vmem:[%s377 + $0xb8] sm:$0xff] %v424
                %v426 = vld [vmem:[%s376 + $0x180] sm:$0xff]
                %427 = vst [vmem:[%s377 + $0xc0] sm:$0xff] %v426
                %v428 = vld [vmem:[%s376 + $0x188] sm:$0xff]
                %429 = vst [vmem:[%s377 + $0xc8] sm:$0xff] %v428
                %v430 = vld [vmem:[%s376 + $0x190] sm:$0xff]
                %431 = vst [vmem:[%s377 + $0xd0] sm:$0xff] %v430
                %v432 = vld [vmem:[%s376 + $0x198] sm:$0xff]
                %433 = vst [vmem:[%s377 + $0xd8] sm:$0xff] %v432
                %v434 = vld [vmem:[%s376 + $0x1a0] sm:$0xff]
                %435 = vst [vmem:[%s377 + $0xe0] sm:$0xff] %v434
                %v436 = vld [vmem:[%s376 + $0x1a8] sm:$0xff]
                %437 = vst [vmem:[%s377 + $0xe8] sm:$0xff] %v436
                %v438 = vld [vmem:[%s376 + $0x1b0] sm:$0xff]
                %439 = vst [vmem:[%s377 + $0xf0] sm:$0xff] %v438
                %v440 = vld [vmem:[%s376 + $0x1b8] sm:$0xff]
                %441 = vst [vmem:[%s377 + $0xf8] sm:$0xff] %v440
                %v442 = vld [vmem:[%s376 + $0x200] sm:$0xff]
                %443 = vst [vmem:[%s377 + $0x100] sm:$0xff] %v442
                %v444 = vld [vmem:[%s376 + $0x208] sm:$0xff]
                %445 = vst [vmem:[%s377 + $0x108] sm:$0xff] %v444
                %v446 = vld [vmem:[%s376 + $0x210] sm:$0xff]
                %447 = vst [vmem:[%s377 + $0x110] sm:$0xff] %v446
                %v448 = vld [vmem:[%s376 + $0x218] sm:$0xff]
                %449 = vst [vmem:[%s377 + $0x118] sm:$0xff] %v448
                %v450 = vld [vmem:[%s376 + $0x220] sm:$0xff]
                %451 = vst [vmem:[%s377 + $0x120] sm:$0xff] %v450
                %v452 = vld [vmem:[%s376 + $0x228] sm:$0xff]
                %453 = vst [vmem:[%s377 + $0x128] sm:$0xff] %v452
                %v454 = vld [vmem:[%s376 + $0x230] sm:$0xff]
                %455 = vst [vmem:[%s377 + $0x130] sm:$0xff] %v454
                %v456 = vld [vmem:[%s376 + $0x238] sm:$0xff]
                %457 = vst [vmem:[%s377 + $0x138] sm:$0xff] %v456
                %v458 = vld [vmem:[%s376 + $0x280] sm:$0xff]
                %459 = vst [vmem:[%s377 + $0x140] sm:$0xff] %v458
                %v460 = vld [vmem:[%s376 + $0x288] sm:$0xff]
                %461 = vst [vmem:[%s377 + $0x148] sm:$0xff] %v460
                %v462 = vld [vmem:[%s376 + $0x290] sm:$0xff]
                %463 = vst [vmem:[%s377 + $0x150] sm:$0xff] %v462
                %v464 = vld [vmem:[%s376 + $0x298] sm:$0xff]
                %465 = vst [vmem:[%s377 + $0x158] sm:$0xff] %v464
                %v466 = vld [vmem:[%s376 + $0x2a0] sm:$0xff]
                %467 = vst [vmem:[%s377 + $0x160] sm:$0xff] %v466
                %v468 = vld [vmem:[%s376 + $0x2a8] sm:$0xff]
                %469 = vst [vmem:[%s377 + $0x168] sm:$0xff] %v468
                %v470 = vld [vmem:[%s376 + $0x2b0] sm:$0xff]
                %471 = vst [vmem:[%s377 + $0x170] sm:$0xff] %v470
                %v472 = vld [vmem:[%s376 + $0x2b8] sm:$0xff]
                %473 = vst [vmem:[%s377 + $0x178] sm:$0xff] %v472
                %v474 = vld [vmem:[%s376 + $0x300] sm:$0xff]
                %475 = vst [vmem:[%s377 + $0x180] sm:$0xff] %v474
                %v476 = vld [vmem:[%s376 + $0x308] sm:$0xff]
                %477 = vst [vmem:[%s377 + $0x188] sm:$0xff] %v476
                %v478 = vld [vmem:[%s376 + $0x310] sm:$0xff]
                %479 = vst [vmem:[%s377 + $0x190] sm:$0xff] %v478
                %v480 = vld [vmem:[%s376 + $0x318] sm:$0xff]
                %481 = vst [vmem:[%s377 + $0x198] sm:$0xff] %v480
                %v482 = vld [vmem:[%s376 + $0x320] sm:$0xff]
                %483 = vst [vmem:[%s377 + $0x1a0] sm:$0xff] %v482
                %v484 = vld [vmem:[%s376 + $0x328] sm:$0xff]
                %485 = vst [vmem:[%s377 + $0x1a8] sm:$0xff] %v484
                %v486 = vld [vmem:[%s376 + $0x330] sm:$0xff]
                %487 = vst [vmem:[%s377 + $0x1b0] sm:$0xff] %v486
                %v488 = vld [vmem:[%s376 + $0x338] sm:$0xff]
                %489 = vst [vmem:[%s377 + $0x1b8] sm:$0xff] %v488
                %v490 = vld [vmem:[%s376 + $0x380] sm:$0xff]
                %491 = vst [vmem:[%s377 + $0x1c0] sm:$0xff] %v490
                %v492 = vld [vmem:[%s376 + $0x388] sm:$0xff]
                %493 = vst [vmem:[%s377 + $0x1c8] sm:$0xff] %v492
                %v494 = vld [vmem:[%s376 + $0x390] sm:$0xff]
                %495 = vst [vmem:[%s377 + $0x1d0] sm:$0xff] %v494
                %v496 = vld [vmem:[%s376 + $0x398] sm:$0xff]
                %497 = vst [vmem:[%s377 + $0x1d8] sm:$0xff] %v496
                %v498 = vld [vmem:[%s376 + $0x3a0] sm:$0xff]
                %499 = vst [vmem:[%s377 + $0x1e0] sm:$0xff] %v498
                %v500 = vld [vmem:[%s376 + $0x3a8] sm:$0xff]
                %501 = vst [vmem:[%s377 + $0x1e8] sm:$0xff] %v500
                %v502 = vld [vmem:[%s376 + $0x3b0] sm:$0xff]
                %503 = vst [vmem:[%s377 + $0x1f0] sm:$0xff] %v502
                %v504 = vld [vmem:[%s376 + $0x3b8] sm:$0xff]
                %505 = vst [vmem:[%s377 + $0x1f8] sm:$0xff] %v504
              $region77: #{gcn_forward.1} parent=71 // loop_footer
                %s375 = sadd.s32 1, %s371
              $region78: #{gcn_forward.1} parent=71 // loop_footer_branch
                %370 = sbr.rel target = $region74
              $region79: #{gcn_forward.1} parent=71 // loop_exit
                _
            $region72: #{gcn_forward.1} parent=67 // pred_fallthru
              _
            // Predicated region
            $region80: #{gcn_forward.1} parent=67 // pred_check
              _
            $region81: #{gcn_forward.1} parent=67 // pred_check_branch
              %507 = sbr.rel target = $region83
            $region82: #{gcn_forward.1} parent=67 // pred_region
              _
            $region83: #{gcn_forward.1} parent=67 // pred_fallthru
              _
          $region68: #{gcn_forward.1} parent=63 // pred_fallthru
            _
          %508 = vnop
        $region64: #{gcn_forward.1} parent=59 // pred_fallthru
          _
      $region60: #{gcn_forward.1} parent=5 // pred_fallthru
        _
      %p509 = scmp.le.s32.totalorder 1, %s21
      %p510 = scmp.lt.s32.totalorder %s21, 3
      %p511 = pnand %p509, %p510
      %p512 = pneg %p511
      // Predicated region
      $region84: #{gcn_forward.1} parent=5 // pred_check
        _
      $region85: #{gcn_forward.1} parent=5 // pred_check_branch
        %514 = sbr.rel (%p511) target = $region87
      $region86: #{gcn_forward.1} parent=5 // pred_region
        %s515 = ssub.s32 %s21, 1
        %s516 = sand.u32 %s34, 1
        %s517 = sand.u32 %s34, 1
        %s518 = smul.addr %s517, 512
        %s519 = scalar_lea.vmem [#allocation2], %s518
        // Predicated region
        $region88: #{gcn_forward.1} parent=86 // pred_check
          %p520 = pneg %p47
        $region89: #{gcn_forward.1} parent=86 // pred_check_branch
          %522 = sbr.rel (%p520) target = $region91
        $region90: #{gcn_forward.1} parent=86 // pred_region
          _
        $region91: #{gcn_forward.1} parent=86 // pred_fallthru
          _
        %s523 = sand.u32 %s34, 1
        %s524 = sand.u32 %s34, 1
        %s525 = smul.addr %s524, 512
        %s526 = scalar_lea.vmem [#allocation2], %s525
        %p527 = pneg %p47
        %p528 = pneg %p44
        %p529 = pneg %p68
        %p530 = pneg %p65
        %p531 = pneg %p89
        %p532 = pneg %p86
        %p533 = pneg %p110
        %p534 = pneg %p107
        %p535 = pneg %p131
        %p536 = pneg %p128
        %p537 = pneg %p152
        %p538 = pneg %p149
        %p539 = pneg %p173
        %p540 = pneg %p170
        %p541 = pneg %p194
        %p542 = pneg %p191
        %p543 = pneg %p215
        %p544 = pneg %p212
        %p545 = pneg %p236
        %p546 = pneg %p233
        %p547 = pneg %p257
        %p548 = pneg %p254
        %p549 = pneg %p278
        %p550 = pneg %p275
        %p551 = pneg %p304
        %p552 = pneg %p301
        %s553 = sand.u32 %s291, 1
        %s554 = scalar_lea.sflag [#allocation4], %s553
        %s555 = sand.u32 %s291, 1
        %s556 = smul.addr %s555, 4
        %s557 = scalar_lea.vmem [#allocation3], %s556
        %s558 = smul.u32 8, %s26
        %v559 = vld [vmem:[%s519] sm:$0xff]
        %v560 = vld [vmem:[%s519 + $0x8] sm:$0xff]
        %v561 = vld [vmem:[%s519 + $0x10] sm:$0xff]
        %v562 = vld [vmem:[%s519 + $0x18] sm:$0xff]
        %v563 = vld [vmem:[%s519 + $0x20] sm:$0xff]
        %v564 = vld [vmem:[%s519 + $0x28] sm:$0xff]
        %v565 = vld [vmem:[%s519 + $0x30] sm:$0xff]
        %v566 = vld [vmem:[%s519 + $0x38] sm:$0xff]
        %v567 = vld [vmem:[%s519 + $0x40] sm:$0xff]
        %v568 = vld [vmem:[%s519 + $0x48] sm:$0xff]
        %v569 = vld [vmem:[%s519 + $0x50] sm:$0xff]
        %v570 = vld [vmem:[%s519 + $0x58] sm:$0xff]
        %v571 = vld [vmem:[%s519 + $0x60] sm:$0xff]
        %v572 = vld [vmem:[%s519 + $0x68] sm:$0xff]
        %v573 = vld [vmem:[%s519 + $0x70] sm:$0xff]
        %v574 = vld [vmem:[%s519 + $0x78] sm:$0xff]
        %v575 = vld [vmem:[%s519 + $0x80] sm:$0xff]
        %v576 = vld [vmem:[%s519 + $0x88] sm:$0xff]
        %v577 = vld [vmem:[%s519 + $0x90] sm:$0xff]
        %v578 = vld [vmem:[%s519 + $0x98] sm:$0xff]
        %v579 = vld [vmem:[%s519 + $0xa0] sm:$0xff]
        %v580 = vld [vmem:[%s519 + $0xa8] sm:$0xff]
        %v581 = vld [vmem:[%s519 + $0xb0] sm:$0xff]
        %v582 = vld [vmem:[%s519 + $0xb8] sm:$0xff]
        %v583 = vld [vmem:[%s519 + $0xc0] sm:$0xff]
        %v584 = vld [vmem:[%s519 + $0xc8] sm:$0xff]
        %v585 = vld [vmem:[%s519 + $0xd0] sm:$0xff]
        %v586 = vld [vmem:[%s519 + $0xd8] sm:$0xff]
        %v587 = vld [vmem:[%s519 + $0xe0] sm:$0xff]
        %v588 = vld [vmem:[%s519 + $0xe8] sm:$0xff]
        %v589 = vld [vmem:[%s519 + $0xf0] sm:$0xff]
        %v590 = vld [vmem:[%s519 + $0xf8] sm:$0xff]
        %v591 = vld [vmem:[%s519 + $0x100] sm:$0xff]
        %v592 = vld [vmem:[%s519 + $0x108] sm:$0xff]
        %v593 = vld [vmem:[%s519 + $0x110] sm:$0xff]
        %v594 = vld [vmem:[%s519 + $0x118] sm:$0xff]
        %v595 = vld [vmem:[%s519 + $0x120] sm:$0xff]
        %v596 = vld [vmem:[%s519 + $0x128] sm:$0xff]
        %v597 = vld [vmem:[%s519 + $0x130] sm:$0xff]
        %v598 = vld [vmem:[%s519 + $0x138] sm:$0xff]
        %v599 = vld [vmem:[%s519 + $0x140] sm:$0xff]
        %v600 = vld [vmem:[%s519 + $0x148] sm:$0xff]
        %v601 = vld [vmem:[%s519 + $0x150] sm:$0xff]
        %v602 = vld [vmem:[%s519 + $0x158] sm:$0xff]
        %v603 = vld [vmem:[%s519 + $0x160] sm:$0xff]
        %v604 = vld [vmem:[%s519 + $0x168] sm:$0xff]
        %v605 = vld [vmem:[%s519 + $0x170] sm:$0xff]
        %v606 = vld [vmem:[%s519 + $0x178] sm:$0xff]
        %v607 = vld [vmem:[%s519 + $0x180] sm:$0xff]
        %v608 = vld [vmem:[%s519 + $0x188] sm:$0xff]
        %v609 = vld [vmem:[%s519 + $0x190] sm:$0xff]
        %v610 = vld [vmem:[%s519 + $0x198] sm:$0xff]
        %v611 = vld [vmem:[%s519 + $0x1a0] sm:$0xff]
        %v612 = vld [vmem:[%s519 + $0x1a8] sm:$0xff]
        %v613 = vld [vmem:[%s519 + $0x1b0] sm:$0xff]
        %v614 = vld [vmem:[%s519 + $0x1b8] sm:$0xff]
        %v615 = vld [vmem:[%s519 + $0x1c0] sm:$0xff]
        %v616 = vld [vmem:[%s519 + $0x1c8] sm:$0xff]
        %v617 = vld [vmem:[%s519 + $0x1d0] sm:$0xff]
        %v618 = vld [vmem:[%s519 + $0x1d8] sm:$0xff]
        %v619 = vld [vmem:[%s519 + $0x1e0] sm:$0xff]
        %v620 = vld [vmem:[%s519 + $0x1e8] sm:$0xff]
        %v621 = vld [vmem:[%s519 + $0x1f0] sm:$0xff]
        %v622 = vld [vmem:[%s519 + $0x1f8] sm:$0xff]
        %v623 = vld [vmem:[%s1] sm:$0xff]
        %v624 = vld [vmem:[%s1 + $0x8] sm:$0xff]
        %v625 = vld [vmem:[%s1 + $0x10] sm:$0xff]
        %v626 = vld [vmem:[%s1 + $0x18] sm:$0xff]
        %v627 = vld [vmem:[%s1 + $0x20] sm:$0xff]
        %v628 = vld [vmem:[%s1 + $0x28] sm:$0xff]
        %v629 = vld [vmem:[%s1 + $0x30] sm:$0xff]
        %v630 = vld [vmem:[%s1 + $0x38] sm:$0xff]
        %v631 = vld [vmem:[%s1 + $0x40] sm:$0xff]
        %v632 = vld [vmem:[%s1 + $0x48] sm:$0xff]
        %v633 = vld [vmem:[%s1 + $0x50] sm:$0xff]
        %v634 = vld [vmem:[%s1 + $0x58] sm:$0xff]
        %v635 = vld [vmem:[%s1 + $0x60] sm:$0xff]
        %v636 = vld [vmem:[%s1 + $0x68] sm:$0xff]
        %v637 = vld [vmem:[%s1 + $0x70] sm:$0xff]
        %v638 = vld [vmem:[%s1 + $0x78] sm:$0xff]
        %v639 = vld [vmem:[%s1 + $0x80] sm:$0xff]
        %v640 = vld [vmem:[%s1 + $0x88] sm:$0xff]
        %v641 = vld [vmem:[%s1 + $0x90] sm:$0xff]
        %v642 = vld [vmem:[%s1 + $0x98] sm:$0xff]
        %v643 = vld [vmem:[%s1 + $0xa0] sm:$0xff]
        %v644 = vld [vmem:[%s1 + $0xa8] sm:$0xff]
        %v645 = vld [vmem:[%s1 + $0xb0] sm:$0xff]
        %v646 = vld [vmem:[%s1 + $0xb8] sm:$0xff]
        %v647 = vld [vmem:[%s1 + $0xc0] sm:$0xff]
        %v648 = vld [vmem:[%s1 + $0xc8] sm:$0xff]
        %v649 = vld [vmem:[%s1 + $0xd0] sm:$0xff]
        %v650 = vld [vmem:[%s1 + $0xd8] sm:$0xff]
        %v651 = vld [vmem:[%s1 + $0xe0] sm:$0xff]
        %v652 = vld [vmem:[%s1 + $0xe8] sm:$0xff]
        %v653 = vld [vmem:[%s1 + $0xf0] sm:$0xff]
        %v654 = vld [vmem:[%s1 + $0xf8] sm:$0xff]
        %v655 = vld [vmem:[%s1 + $0x100] sm:$0xff]
        %v656 = vld [vmem:[%s1 + $0x108] sm:$0xff]
        %v657 = vld [vmem:[%s1 + $0x110] sm:$0xff]
        %v658 = vld [vmem:[%s1 + $0x118] sm:$0xff]
        %v659 = vld [vmem:[%s1 + $0x120] sm:$0xff]
        %v660 = vld [vmem:[%s1 + $0x128] sm:$0xff]
        %v661 = vld [vmem:[%s1 + $0x130] sm:$0xff]
        %v662 = vld [vmem:[%s1 + $0x138] sm:$0xff]
        %v663 = vld [vmem:[%s1 + $0x140] sm:$0xff]
        %v664 = vld [vmem:[%s1 + $0x148] sm:$0xff]
        %v665 = vld [vmem:[%s1 + $0x150] sm:$0xff]
        %v666 = vld [vmem:[%s1 + $0x158] sm:$0xff]
        %v667 = vld [vmem:[%s1 + $0x160] sm:$0xff]
        %v668 = vld [vmem:[%s1 + $0x168] sm:$0xff]
        %v669 = vld [vmem:[%s1 + $0x170] sm:$0xff]
        %v670 = vld [vmem:[%s1 + $0x178] sm:$0xff]
        %v671 = vld [vmem:[%s1 + $0x180] sm:$0xff]
        %v672 = vld [vmem:[%s1 + $0x188] sm:$0xff]
        %v673 = vld [vmem:[%s1 + $0x190] sm:$0xff]
        %v674 = vld [vmem:[%s1 + $0x198] sm:$0xff]
        %v675 = vld [vmem:[%s1 + $0x1a0] sm:$0xff]
        %v676 = vld [vmem:[%s1 + $0x1a8] sm:$0xff]
        %v677 = vld [vmem:[%s1 + $0x1b0] sm:$0xff]
        %v678 = vld [vmem:[%s1 + $0x1b8] sm:$0xff]
        %v679 = vld [vmem:[%s1 + $0x1c0] sm:$0xff]
        %v680 = vld [vmem:[%s1 + $0x1c8] sm:$0xff]
        %v681 = vld [vmem:[%s1 + $0x1d0] sm:$0xff]
        %v682 = vld [vmem:[%s1 + $0x1d8] sm:$0xff]
        %v683 = vld [vmem:[%s1 + $0x1e0] sm:$0xff]
        %v684 = vld [vmem:[%s1 + $0x1e8] sm:$0xff]
        %v685 = vld [vmem:[%s1 + $0x1f0] sm:$0xff]
        %v686 = vld [vmem:[%s1 + $0x1f8] sm:$0xff]
        %v687 = vld [vmem:[%s1 + $0x200] sm:$0xff]
        %v688 = vld [vmem:[%s1 + $0x208] sm:$0xff]
        %v689 = vld [vmem:[%s1 + $0x210] sm:$0xff]
        %v690 = vld [vmem:[%s1 + $0x218] sm:$0xff]
        %v691 = vld [vmem:[%s1 + $0x220] sm:$0xff]
        %v692 = vld [vmem:[%s1 + $0x228] sm:$0xff]
        %v693 = vld [vmem:[%s1 + $0x230] sm:$0xff]
        %v694 = vld [vmem:[%s1 + $0x238] sm:$0xff]
        %v695 = vld [vmem:[%s1 + $0x240] sm:$0xff]
        %v696 = vld [vmem:[%s1 + $0x248] sm:$0xff]
        %v697 = vld [vmem:[%s1 + $0x250] sm:$0xff]
        %v698 = vld [vmem:[%s1 + $0x258] sm:$0xff]
        %v699 = vld [vmem:[%s1 + $0x260] sm:$0xff]
        %v700 = vld [vmem:[%s1 + $0x268] sm:$0xff]
        %v701 = vld [vmem:[%s1 + $0x270] sm:$0xff]
        %v702 = vld [vmem:[%s1 + $0x278] sm:$0xff]
        %v703 = vld [vmem:[%s1 + $0x280] sm:$0xff]
        %v704 = vld [vmem:[%s1 + $0x288] sm:$0xff]
        %v705 = vld [vmem:[%s1 + $0x290] sm:$0xff]
        %v706 = vld [vmem:[%s1 + $0x298] sm:$0xff]
        %v707 = vld [vmem:[%s1 + $0x2a0] sm:$0xff]
        %v708 = vld [vmem:[%s1 + $0x2a8] sm:$0xff]
        %v709 = vld [vmem:[%s1 + $0x2b0] sm:$0xff]
        %v710 = vld [vmem:[%s1 + $0x2b8] sm:$0xff]
        %v711 = vld [vmem:[%s1 + $0x2c0] sm:$0xff]
        %v712 = vld [vmem:[%s1 + $0x2c8] sm:$0xff]
        %v713 = vld [vmem:[%s1 + $0x2d0] sm:$0xff]
        %v714 = vld [vmem:[%s1 + $0x2d8] sm:$0xff]
        %v715 = vld [vmem:[%s1 + $0x2e0] sm:$0xff]
        %v716 = vld [vmem:[%s1 + $0x2e8] sm:$0xff]
        %v717 = vld [vmem:[%s1 + $0x2f0] sm:$0xff]
        %v718 = vld [vmem:[%s1 + $0x2f8] sm:$0xff]
        %v719 = vld [vmem:[%s1 + $0x300] sm:$0xff]
        %v720 = vld [vmem:[%s1 + $0x308] sm:$0xff]
        %v721 = vld [vmem:[%s1 + $0x310] sm:$0xff]
        %v722 = vld [vmem:[%s1 + $0x318] sm:$0xff]
        %v723 = vld [vmem:[%s1 + $0x320] sm:$0xff]
        %v724 = vld [vmem:[%s1 + $0x328] sm:$0xff]
        %v725 = vld [vmem:[%s1 + $0x330] sm:$0xff]
        %v726 = vld [vmem:[%s1 + $0x338] sm:$0xff]
        %v727 = vld [vmem:[%s1 + $0x340] sm:$0xff]
        %v728 = vld [vmem:[%s1 + $0x348] sm:$0xff]
        %v729 = vld [vmem:[%s1 + $0x350] sm:$0xff]
        %v730 = vld [vmem:[%s1 + $0x358] sm:$0xff]
        %v731 = vld [vmem:[%s1 + $0x360] sm:$0xff]
        %v732 = vld [vmem:[%s1 + $0x368] sm:$0xff]
        %v733 = vld [vmem:[%s1 + $0x370] sm:$0xff]
        %v734 = vld [vmem:[%s1 + $0x378] sm:$0xff]
        %v735 = vld [vmem:[%s1 + $0x380] sm:$0xff]
        %v736 = vld [vmem:[%s1 + $0x388] sm:$0xff]
        %v737 = vld [vmem:[%s1 + $0x390] sm:$0xff]
        %v738 = vld [vmem:[%s1 + $0x398] sm:$0xff]
        %v739 = vld [vmem:[%s1 + $0x3a0] sm:$0xff]
        %v740 = vld [vmem:[%s1 + $0x3a8] sm:$0xff]
        %v741 = vld [vmem:[%s1 + $0x3b0] sm:$0xff]
        %v742 = vld [vmem:[%s1 + $0x3b8] sm:$0xff]
        %v743 = vld [vmem:[%s1 + $0x3c0] sm:$0xff]
        %v744 = vld [vmem:[%s1 + $0x3c8] sm:$0xff]
        %v745 = vld [vmem:[%s1 + $0x3d0] sm:$0xff]
        %v746 = vld [vmem:[%s1 + $0x3d8] sm:$0xff]
        %v747 = vld [vmem:[%s1 + $0x3e0] sm:$0xff]
        %v748 = vld [vmem:[%s1 + $0x3e8] sm:$0xff]
        %v749 = vld [vmem:[%s1 + $0x3f0] sm:$0xff]
        %v750 = vld [vmem:[%s1 + $0x3f8] sm:$0xff]
        %v751 = vld [vmem:[%s10] sm:$0x1]
        %v753 = vperm.slane %v751, 0
        %755 = vmatpush.msra.mxu0 %v638
        %756 = vmatpush.msra.mxu0 %v637
        %757 = vmatpush.msra.mxu0 %v636
        %758 = vmatpush.msra.mxu0 %v635
        %759 = vmatpush.msra.mxu0 %v634
        %760 = vmatpush.msra.mxu0 %v633
        %761 = vmatpush.msra.mxu0 %v632
        %762 = vmatpush.msra.mxu0 %v631
        %763 = vmatpush.msra.mxu0 %v630
        %764 = vmatpush.msra.mxu0 %v629
        %765 = vmatpush.msra.mxu0 %v628
        %766 = vmatpush.msra.mxu0 %v627
        %767 = vmatpush.msra.mxu0 %v626
        %768 = vmatpush.msra.mxu0 %v625
        %769 = vmatpush.msra.mxu0 %v624
        %770 = vmatpush.msra.mxu0 %v623
        %771 = vmatmul.f32.gmra.mxu0 %v559
        %v772 = vpop.f32.mrf.mxu0
        %v773 = vadd.f32 %v753, %v772
        %774 = vmatmul.f32.gmra.mxu0 %v567
        %v775 = vpop.f32.mrf.mxu0
        %v776 = vadd.f32 %v753, %v775
        %777 = vmatmul.f32.gmra.mxu0 %v575
        %v778 = vpop.f32.mrf.mxu0
        %v779 = vadd.f32 %v753, %v778
        %780 = vmatmul.f32.gmra.mxu0 %v583
        %v781 = vpop.f32.mrf.mxu0
        %v782 = vadd.f32 %v753, %v781
        %783 = vmatmul.f32.gmra.mxu0 %v591
        %v784 = vpop.f32.mrf.mxu0
        %v785 = vadd.f32 %v753, %v784
        %786 = vmatmul.f32.gmra.mxu0 %v599
        %v787 = vpop.f32.mrf.mxu0
        %v788 = vadd.f32 %v753, %v787
        %789 = vmatmul.f32.gmra.mxu0 %v607
        %v790 = vpop.f32.mrf.mxu0
        %v791 = vadd.f32 %v753, %v790
        %792 = vmatmul.f32.gmra.mxu0 %v615
        %v793 = vpop.f32.mrf.mxu0
        %v794 = vadd.f32 %v753, %v793
        %795 = vdwg.mxu0
        %796 = vmatpush.msra.mxu0 %v654
        %797 = vmatpush.msra.mxu0 %v653
        %798 = vmatpush.msra.mxu0 %v652
        %799 = vmatpush.msra.mxu0 %v651
        %800 = vmatpush.msra.mxu0 %v650
        %801 = vmatpush.msra.mxu0 %v649
        %802 = vmatpush.msra.mxu0 %v648
        %803 = vmatpush.msra.mxu0 %v647
        %804 = vmatpush.msra.mxu0 %v646
        %805 = vmatpush.msra.mxu0 %v645
        %806 = vmatpush.msra.mxu0 %v644
        %807 = vmatpush.msra.mxu0 %v643
        %808 = vmatpush.msra.mxu0 %v642
        %809 = vmatpush.msra.mxu0 %v641
        %810 = vmatpush.msra.mxu0 %v640
        %811 = vmatpush.msra.mxu0 %v639
        %812 = vmatmul.f32.gmra.mxu0 %v560
        %v813 = vpop.f32.mrf.mxu0
        %v814 = vadd.f32 %v773, %v813
        %815 = vmatmul.f32.gmra.mxu0 %v568
        %v816 = vpop.f32.mrf.mxu0
        %v817 = vadd.f32 %v776, %v816
        %818 = vmatmul.f32.gmra.mxu0 %v576
        %v819 = vpop.f32.mrf.mxu0
        %v820 = vadd.f32 %v779, %v819
        %821 = vmatmul.f32.gmra.mxu0 %v584
        %v822 = vpop.f32.mrf.mxu0
        %v823 = vadd.f32 %v782, %v822
        %824 = vmatmul.f32.gmra.mxu0 %v592
        %v825 = vpop.f32.mrf.mxu0
        %v826 = vadd.f32 %v785, %v825
        %827 = vmatmul.f32.gmra.mxu0 %v600
        %v828 = vpop.f32.mrf.mxu0
        %v829 = vadd.f32 %v788, %v828
        %830 = vmatmul.f32.gmra.mxu0 %v608
        %v831 = vpop.f32.mrf.mxu0
        %v832 = vadd.f32 %v791, %v831
        %833 = vmatmul.f32.gmra.mxu0 %v616
        %v834 = vpop.f32.mrf.mxu0
        %v835 = vadd.f32 %v794, %v834
        %836 = vdwg.mxu0
        %837 = vmatpush.msra.mxu0 %v670
        %838 = vmatpush.msra.mxu0 %v669
        %839 = vmatpush.msra.mxu0 %v668
        %840 = vmatpush.msra.mxu0 %v667
        %841 = vmatpush.msra.mxu0 %v666
        %842 = vmatpush.msra.mxu0 %v665
        %843 = vmatpush.msra.mxu0 %v664
        %844 = vmatpush.msra.mxu0 %v663
        %845 = vmatpush.msra.mxu0 %v662
        %846 = vmatpush.msra.mxu0 %v661
        %847 = vmatpush.msra.mxu0 %v660
        %848 = vmatpush.msra.mxu0 %v659
        %849 = vmatpush.msra.mxu0 %v658
        %850 = vmatpush.msra.mxu0 %v657
        %851 = vmatpush.msra.mxu0 %v656
        %852 = vmatpush.msra.mxu0 %v655
        %853 = vmatmul.f32.gmra.mxu0 %v561
        %v854 = vpop.f32.mrf.mxu0
        %v855 = vadd.f32 %v814, %v854
        %856 = vmatmul.f32.gmra.mxu0 %v569
        %v857 = vpop.f32.mrf.mxu0
        %v858 = vadd.f32 %v817, %v857
        %859 = vmatmul.f32.gmra.mxu0 %v577
        %v860 = vpop.f32.mrf.mxu0
        %v861 = vadd.f32 %v820, %v860
        %862 = vmatmul.f32.gmra.mxu0 %v585
        %v863 = vpop.f32.mrf.mxu0
        %v864 = vadd.f32 %v823, %v863
        %865 = vmatmul.f32.gmra.mxu0 %v593
        %v866 = vpop.f32.mrf.mxu0
        %v867 = vadd.f32 %v826, %v866
        %868 = vmatmul.f32.gmra.mxu0 %v601
        %v869 = vpop.f32.mrf.mxu0
        %v870 = vadd.f32 %v829, %v869
        %871 = vmatmul.f32.gmra.mxu0 %v609
        %v872 = vpop.f32.mrf.mxu0
        %v873 = vadd.f32 %v832, %v872
        %874 = vmatmul.f32.gmra.mxu0 %v617
        %v875 = vpop.f32.mrf.mxu0
        %v876 = vadd.f32 %v835, %v875
        %877 = vdwg.mxu0
        %878 = vmatpush.msra.mxu0 %v686
        %879 = vmatpush.msra.mxu0 %v685
        %880 = vmatpush.msra.mxu0 %v684
        %881 = vmatpush.msra.mxu0 %v683
        %882 = vmatpush.msra.mxu0 %v682
        %883 = vmatpush.msra.mxu0 %v681
        %884 = vmatpush.msra.mxu0 %v680
        %885 = vmatpush.msra.mxu0 %v679
        %886 = vmatpush.msra.mxu0 %v678
        %887 = vmatpush.msra.mxu0 %v677
        %888 = vmatpush.msra.mxu0 %v676
        %889 = vmatpush.msra.mxu0 %v675
        %890 = vmatpush.msra.mxu0 %v674
        %891 = vmatpush.msra.mxu0 %v673
        %892 = vmatpush.msra.mxu0 %v672
        %893 = vmatpush.msra.mxu0 %v671
        %894 = vmatmul.f32.gmra.mxu0 %v562
        %v895 = vpop.f32.mrf.mxu0
        %v896 = vadd.f32 %v855, %v895
        %897 = vmatmul.f32.gmra.mxu0 %v570
        %v898 = vpop.f32.mrf.mxu0
        %v899 = vadd.f32 %v858, %v898
        %900 = vmatmul.f32.gmra.mxu0 %v578
        %v901 = vpop.f32.mrf.mxu0
        %v902 = vadd.f32 %v861, %v901
        %903 = vmatmul.f32.gmra.mxu0 %v586
        %v904 = vpop.f32.mrf.mxu0
        %v905 = vadd.f32 %v864, %v904
        %906 = vmatmul.f32.gmra.mxu0 %v594
        %v907 = vpop.f32.mrf.mxu0
        %v908 = vadd.f32 %v867, %v907
        %909 = vmatmul.f32.gmra.mxu0 %v602
        %v910 = vpop.f32.mrf.mxu0
        %v911 = vadd.f32 %v870, %v910
        %912 = vmatmul.f32.gmra.mxu0 %v610
        %v913 = vpop.f32.mrf.mxu0
        %v914 = vadd.f32 %v873, %v913
        %915 = vmatmul.f32.gmra.mxu0 %v618
        %v916 = vpop.f32.mrf.mxu0
        %v917 = vadd.f32 %v876, %v916
        %918 = vdwg.mxu0
        %919 = vmatpush.msra.mxu0 %v702
        %920 = vmatpush.msra.mxu0 %v701
        %921 = vmatpush.msra.mxu0 %v700
        %922 = vmatpush.msra.mxu0 %v699
        %923 = vmatpush.msra.mxu0 %v698
        %924 = vmatpush.msra.mxu0 %v697
        %925 = vmatpush.msra.mxu0 %v696
        %926 = vmatpush.msra.mxu0 %v695
        %927 = vmatpush.msra.mxu0 %v694
        %928 = vmatpush.msra.mxu0 %v693
        %929 = vmatpush.msra.mxu0 %v692
        %930 = vmatpush.msra.mxu0 %v691
        %931 = vmatpush.msra.mxu0 %v690
        %932 = vmatpush.msra.mxu0 %v689
        %933 = vmatpush.msra.mxu0 %v688
        %934 = vmatpush.msra.mxu0 %v687
        %935 = vmatmul.f32.gmra.mxu0 %v563
        %v936 = vpop.f32.mrf.mxu0
        %v937 = vadd.f32 %v896, %v936
        %938 = vmatmul.f32.gmra.mxu0 %v571
        %v939 = vpop.f32.mrf.mxu0
        %v940 = vadd.f32 %v899, %v939
        %941 = vmatmul.f32.gmra.mxu0 %v579
        %v942 = vpop.f32.mrf.mxu0
        %v943 = vadd.f32 %v902, %v942
        %944 = vmatmul.f32.gmra.mxu0 %v587
        %v945 = vpop.f32.mrf.mxu0
        %v946 = vadd.f32 %v905, %v945
        %947 = vmatmul.f32.gmra.mxu0 %v595
        %v948 = vpop.f32.mrf.mxu0
        %v949 = vadd.f32 %v908, %v948
        %950 = vmatmul.f32.gmra.mxu0 %v603
        %v951 = vpop.f32.mrf.mxu0
        %v952 = vadd.f32 %v911, %v951
        %953 = vmatmul.f32.gmra.mxu0 %v611
        %v954 = vpop.f32.mrf.mxu0
        %v955 = vadd.f32 %v914, %v954
        %956 = vmatmul.f32.gmra.mxu0 %v619
        %v957 = vpop.f32.mrf.mxu0
        %v958 = vadd.f32 %v917, %v957
        %959 = vdwg.mxu0
        %960 = vmatpush.msra.mxu0 %v718
        %961 = vmatpush.msra.mxu0 %v717
        %962 = vmatpush.msra.mxu0 %v716
        %963 = vmatpush.msra.mxu0 %v715
        %964 = vmatpush.msra.mxu0 %v714
        %965 = vmatpush.msra.mxu0 %v713
        %966 = vmatpush.msra.mxu0 %v712
        %967 = vmatpush.msra.mxu0 %v711
        %968 = vmatpush.msra.mxu0 %v710
        %969 = vmatpush.msra.mxu0 %v709
        %970 = vmatpush.msra.mxu0 %v708
        %971 = vmatpush.msra.mxu0 %v707
        %972 = vmatpush.msra.mxu0 %v706
        %973 = vmatpush.msra.mxu0 %v705
        %974 = vmatpush.msra.mxu0 %v704
        %975 = vmatpush.msra.mxu0 %v703
        %976 = vmatmul.f32.gmra.mxu0 %v564
        %v977 = vpop.f32.mrf.mxu0
        %v978 = vadd.f32 %v937, %v977
        %979 = vmatmul.f32.gmra.mxu0 %v572
        %v980 = vpop.f32.mrf.mxu0
        %v981 = vadd.f32 %v940, %v980
        %982 = vmatmul.f32.gmra.mxu0 %v580
        %v983 = vpop.f32.mrf.mxu0
        %v984 = vadd.f32 %v943, %v983
        %985 = vmatmul.f32.gmra.mxu0 %v588
        %v986 = vpop.f32.mrf.mxu0
        %v987 = vadd.f32 %v946, %v986
        %988 = vmatmul.f32.gmra.mxu0 %v596
        %v989 = vpop.f32.mrf.mxu0
        %v990 = vadd.f32 %v949, %v989
        %991 = vmatmul.f32.gmra.mxu0 %v604
        %v992 = vpop.f32.mrf.mxu0
        %v993 = vadd.f32 %v952, %v992
        %994 = vmatmul.f32.gmra.mxu0 %v612
        %v995 = vpop.f32.mrf.mxu0
        %v996 = vadd.f32 %v955, %v995
        %997 = vmatmul.f32.gmra.mxu0 %v620
        %v998 = vpop.f32.mrf.mxu0
        %v999 = vadd.f32 %v958, %v998
        %1000 = vdwg.mxu0
        %1001 = vmatpush.msra.mxu0 %v734
        %1002 = vmatpush.msra.mxu0 %v733
        %1003 = vmatpush.msra.mxu0 %v732
        %1004 = vmatpush.msra.mxu0 %v731
        %1005 = vmatpush.msra.mxu0 %v730
        %1006 = vmatpush.msra.mxu0 %v729
        %1007 = vmatpush.msra.mxu0 %v728
        %1008 = vmatpush.msra.mxu0 %v727
        %1009 = vmatpush.msra.mxu0 %v726
        %1010 = vmatpush.msra.mxu0 %v725
        %1011 = vmatpush.msra.mxu0 %v724
        %1012 = vmatpush.msra.mxu0 %v723
        %1013 = vmatpush.msra.mxu0 %v722
        %1014 = vmatpush.msra.mxu0 %v721
        %1015 = vmatpush.msra.mxu0 %v720
        %1016 = vmatpush.msra.mxu0 %v719
        %1017 = vmatmul.f32.gmra.mxu0 %v565
        %v1018 = vpop.f32.mrf.mxu0
        %v1019 = vadd.f32 %v978, %v1018
        %1020 = vmatmul.f32.gmra.mxu0 %v573
        %v1021 = vpop.f32.mrf.mxu0
        %v1022 = vadd.f32 %v981, %v1021
        %1023 = vmatmul.f32.gmra.mxu0 %v581
        %v1024 = vpop.f32.mrf.mxu0
        %v1025 = vadd.f32 %v984, %v1024
        %1026 = vmatmul.f32.gmra.mxu0 %v589
        %v1027 = vpop.f32.mrf.mxu0
        %v1028 = vadd.f32 %v987, %v1027
        %1029 = vmatmul.f32.gmra.mxu0 %v597
        %v1030 = vpop.f32.mrf.mxu0
        %v1031 = vadd.f32 %v990, %v1030
        %1032 = vmatmul.f32.gmra.mxu0 %v605
        %v1033 = vpop.f32.mrf.mxu0
        %v1034 = vadd.f32 %v993, %v1033
        %1035 = vmatmul.f32.gmra.mxu0 %v613
        %v1036 = vpop.f32.mrf.mxu0
        %v1037 = vadd.f32 %v996, %v1036
        %1038 = vmatmul.f32.gmra.mxu0 %v621
        %v1039 = vpop.f32.mrf.mxu0
        %v1040 = vadd.f32 %v999, %v1039
        %1041 = vdwg.mxu0
        %1042 = vmatpush.msra.mxu0 %v750
        %1043 = vmatpush.msra.mxu0 %v749
        %1044 = vmatpush.msra.mxu0 %v748
        %1045 = vmatpush.msra.mxu0 %v747
        %1046 = vmatpush.msra.mxu0 %v746
        %1047 = vmatpush.msra.mxu0 %v745
        %1048 = vmatpush.msra.mxu0 %v744
        %1049 = vmatpush.msra.mxu0 %v743
        %1050 = vmatpush.msra.mxu0 %v742
        %1051 = vmatpush.msra.mxu0 %v741
        %1052 = vmatpush.msra.mxu0 %v740
        %1053 = vmatpush.msra.mxu0 %v739
        %1054 = vmatpush.msra.mxu0 %v738
        %1055 = vmatpush.msra.mxu0 %v737
        %1056 = vmatpush.msra.mxu0 %v736
        %1057 = vmatpush.msra.mxu0 %v735
        %1058 = vmatmul.f32.gmra.mxu0 %v566
        %v1059 = vpop.f32.mrf.mxu0
        %v1060 = vadd.f32 %v1019, %v1059
        %1061 = vmatmul.f32.gmra.mxu0 %v574
        %v1062 = vpop.f32.mrf.mxu0
        %v1063 = vadd.f32 %v1022, %v1062
        %1064 = vmatmul.f32.gmra.mxu0 %v582
        %v1065 = vpop.f32.mrf.mxu0
        %v1066 = vadd.f32 %v1025, %v1065
        %1067 = vmatmul.f32.gmra.mxu0 %v590
        %v1068 = vpop.f32.mrf.mxu0
        %v1069 = vadd.f32 %v1028, %v1068
        %1070 = vmatmul.f32.gmra.mxu0 %v598
        %v1071 = vpop.f32.mrf.mxu0
        %v1072 = vadd.f32 %v1031, %v1071
        %1073 = vmatmul.f32.gmra.mxu0 %v606
        %v1074 = vpop.f32.mrf.mxu0
        %v1075 = vadd.f32 %v1034, %v1074
        %1076 = vmatmul.f32.gmra.mxu0 %v614
        %v1077 = vpop.f32.mrf.mxu0
        %v1078 = vadd.f32 %v1037, %v1077
        %1079 = vmatmul.f32.gmra.mxu0 %v622
        %v1080 = vpop.f32.mrf.mxu0
        %v1081 = vadd.f32 %v1040, %v1080
        %1082 = vdwg.mxu0
        %v1083 = vld [vmem:[%s5] sm:$0xff]
        %v1084 = vld [vmem:[%s5 + $0x8] sm:$0xff]
        %v1085 = vld [vmem:[%s5 + $0x10] sm:$0xff]
        %v1086 = vld [vmem:[%s5 + $0x18] sm:$0xff]
        %v1087 = vld [vmem:[%s5 + $0x20] sm:$0xff]
        %v1088 = vld [vmem:[%s5 + $0x28] sm:$0xff]
        %v1089 = vld [vmem:[%s5 + $0x30] sm:$0xff]
        %v1090 = vld [vmem:[%s5 + $0x38] sm:$0xff]
        %v1091 = vld [vmem:[%s5 + $0x40] sm:$0x3]
        %v1092 = vld [vmem:[%s9] sm:$0xff]
        %v1093 = vld [vmem:[%s9 + $0x8] sm:$0xff]
        %v1094 = vld [vmem:[%s9 + $0x10] sm:$0xff]
        %v1095 = vld [vmem:[%s9 + $0x18] sm:$0xff]
        %v1096 = vld [vmem:[%s9 + $0x20] sm:$0xff]
        %v1097 = vld [vmem:[%s9 + $0x28] sm:$0xff]
        %v1098 = vld [vmem:[%s9 + $0x30] sm:$0xff]
        %v1099 = vld [vmem:[%s9 + $0x38] sm:$0xff]
        %v1100 = vld [vmem:[%s9 + $0x40] sm:$0x3]
        %1102 = vset.pattern.permute.xlu0 0
        %1103 = vperm.xlu0 %1102, %v1092
        %v1104 = vpop.permute.xlu0 %1103
        %1107 = vset.pattern.permute.xlu0 0
        %1108 = vperm.xlu0 %1107, %v1093
        %v1109 = vpop.permute.xlu0 %1108
        %1112 = vset.pattern.permute.xlu0 0
        %1113 = vperm.xlu0 %1112, %v1094
        %v1114 = vpop.permute.xlu0 %1113
        %1117 = vset.pattern.permute.xlu0 0
        %1118 = vperm.xlu0 %1117, %v1095
        %v1119 = vpop.permute.xlu0 %1118
        %1122 = vset.pattern.permute.xlu0 0
        %1123 = vperm.xlu0 %1122, %v1096
        %v1124 = vpop.permute.xlu0 %1123
        %1127 = vset.pattern.permute.xlu0 0
        %1128 = vperm.xlu0 %1127, %v1097
        %v1129 = vpop.permute.xlu0 %1128
        %1132 = vset.pattern.permute.xlu0 0
        %1133 = vperm.xlu0 %1132, %v1098
        %v1134 = vpop.permute.xlu0 %1133
        %1137 = vset.pattern.permute.xlu0 0
        %1138 = vperm.xlu0 %1137, %v1099
        %v1139 = vpop.permute.xlu0 %1138
        %1142 = vset.pattern.permute.xlu0 0
        %1143 = vperm.xlu0 %1142, %v1100
        %v1144 = vpop.permute.xlu0 %1143
        %vm1146 = vcmask 523264
        %v1148 = vsel %vm1146, %v1083, 0
        %v1151 = vsel %vm1146, %v1084, 0
        %v1154 = vsel %vm1146, %v1085, 0
        %v1157 = vsel %vm1146, %v1086, 0
        %v1160 = vsel %vm1146, %v1087, 0
        %v1163 = vsel %vm1146, %v1088, 0
        %v1166 = vsel %vm1146, %v1089, 0
        %v1169 = vsel %vm1146, %v1090, 0
        %v1172 = vsel %vm1146, %v1091, 0
        %1174 = vmatpush.msra.mxu0 0.0
        %1175 = vmatpush.msra.mxu0 0.0
        %1176 = vmatpush.msra.mxu0 0.0
        %1177 = vmatpush.msra.mxu0 0.0
        %1178 = vmatpush.msra.mxu0 0.0
        %1179 = vmatpush.msra.mxu0 0.0
        %1180 = vmatpush.msra.mxu0 0.0
        %1181 = vmatpush.msra.mxu0 0.0
        %1182 = vmatpush.msra.mxu0 %v1081
        %1183 = vmatpush.msra.mxu0 %v1078
        %1184 = vmatpush.msra.mxu0 %v1075
        %1185 = vmatpush.msra.mxu0 %v1072
        %1186 = vmatpush.msra.mxu0 %v1069
        %1187 = vmatpush.msra.mxu0 %v1066
        %1188 = vmatpush.msra.mxu0 %v1063
        %1189 = vmatpush.msra.mxu0 %v1060
        %1190 = vmatmul.f32.gmra.mxu0 %v1148
        %v1191 = vpop.f32.mrf.mxu0
        %v1192 = vadd.f32 %v1104, %v1191
        %1193 = vmatmul.f32.gmra.mxu0 %v1151
        %v1194 = vpop.f32.mrf.mxu0
        %v1195 = vadd.f32 %v1109, %v1194
        %1196 = vmatmul.f32.gmra.mxu0 %v1154
        %v1197 = vpop.f32.mrf.mxu0
        %v1198 = vadd.f32 %v1114, %v1197
        %1199 = vmatmul.f32.gmra.mxu0 %v1157
        %v1200 = vpop.f32.mrf.mxu0
        %v1201 = vadd.f32 %v1119, %v1200
        %1202 = vmatmul.f32.gmra.mxu0 %v1160
        %v1203 = vpop.f32.mrf.mxu0
        %v1204 = vadd.f32 %v1124, %v1203
        %1205 = vmatmul.f32.gmra.mxu0 %v1163
        %v1206 = vpop.f32.mrf.mxu0
        %v1207 = vadd.f32 %v1129, %v1206
        %1208 = vmatmul.f32.gmra.mxu0 %v1166
        %v1209 = vpop.f32.mrf.mxu0
        %v1210 = vadd.f32 %v1134, %v1209
        %1211 = vmatmul.f32.gmra.mxu0 %v1169
        %v1212 = vpop.f32.mrf.mxu0
        %v1213 = vadd.f32 %v1139, %v1212
        %1214 = vmatmul.f32.gmra.mxu0 %v1172
        %v1215 = vpop.f32.mrf.mxu0
        %v1216 = vadd.f32 %v1144, %v1215
        %1217 = vdwg.mxu0
        %v1218 = vld [vmem:[%s6] sm:$0xff]
        %v1219 = vld [vmem:[%s6 + $0x8] sm:$0xff]
        %v1220 = vld [vmem:[%s6 + $0x10] sm:$0xff]
        %v1221 = vld [vmem:[%s6 + $0x18] sm:$0xff]
        %v1222 = vld [vmem:[%s6 + $0x20] sm:$0xff]
        %v1223 = vld [vmem:[%s6 + $0x28] sm:$0xff]
        %v1224 = vld [vmem:[%s6 + $0x30] sm:$0xff]
        %v1225 = vld [vmem:[%s6 + $0x38] sm:$0xff]
        %v1226 = vld [vmem:[%s6 + $0x40] sm:$0xff]
        %v1227 = vld [vmem:[%s6 + $0x48] sm:$0xff]
        %v1228 = vld [vmem:[%s6 + $0x50] sm:$0xff]
        %v1229 = vld [vmem:[%s6 + $0x58] sm:$0xff]
        %v1230 = vld [vmem:[%s6 + $0x60] sm:$0xff]
        %v1231 = vld [vmem:[%s6 + $0x68] sm:$0xff]
        %v1232 = vld [vmem:[%s6 + $0x70] sm:$0xff]
        %v1233 = vld [vmem:[%s6 + $0x78] sm:$0xff]
        %1234 = vxpose.xlu0.b32.start [1/16] %v1216, 128
        %1235 = vxpose.xlu0.b32.cont [2/16] 0.0, 128
        %1236 = vxpose.xlu0.b32.cont [3/16] 0.0, 128
        %1237 = vxpose.xlu0.b32.cont [4/16] 0.0, 128
        %1238 = vxpose.xlu0.b32.cont [5/16] 0.0, 128
        %1239 = vxpose.xlu0.b32.cont [6/16] 0.0, 128
        %1240 = vxpose.xlu0.b32.cont [7/16] 0.0, 128
        %1241 = vxpose.xlu0.b32.cont [8/16] 0.0, 128
        %1242 = vxpose.xlu0.b32.cont [9/16] 0.0, 128
        %1243 = vxpose.xlu0.b32.cont [10/16] 0.0, 128
        %1244 = vxpose.xlu0.b32.cont [11/16] 0.0, 128
        %1245 = vxpose.xlu0.b32.cont [12/16] 0.0, 128
        %1246 = vxpose.xlu0.b32.cont [13/16] 0.0, 128
        %1247 = vxpose.xlu0.b32.cont [14/16] 0.0, 128
        %1248 = vxpose.xlu0.b32.cont [15/16] 0.0, 128
        %1249 = vxpose.xlu0.b32.end [16/16] 0.0, 128
        %v1250 = vpop.trf.xlu0
        %v1251 = vpop.trf.xlu0
        %v1252 = vpop.trf.xlu0
        %v1253 = vpop.trf.xlu0
        %v1254 = vpop.trf.xlu0
        %v1255 = vpop.trf.xlu0
        %v1256 = vpop.trf.xlu0
        %v1257 = vpop.trf.xlu0
        %v1258 = vpop.trf.xlu0
        %v1259 = vpop.trf.xlu0
        %v1260 = vpop.trf.xlu0
        %v1261 = vpop.trf.xlu0
        %v1262 = vpop.trf.xlu0
        %v1263 = vpop.trf.xlu0
        %v1264 = vpop.trf.xlu0
        %v1265 = vpop.trf.xlu0
        %1267 = vset.pattern.permute.xlu0 0
        %1268 = vperm.xlu0 %1267, %v1250
        %v1269 = vpop.permute.xlu0 %1268
        %1272 = vset.pattern.permute.xlu0 0
        %1273 = vperm.xlu0 %1272, %v1251
        %v1274 = vpop.permute.xlu0 %1273
        %1277 = vset.pattern.permute.xlu0 0
        %1278 = vperm.xlu0 %1277, %v1252
        %v1279 = vpop.permute.xlu0 %1278
        %1282 = vset.pattern.permute.xlu0 0
        %1283 = vperm.xlu0 %1282, %v1253
        %v1284 = vpop.permute.xlu0 %1283
        %1287 = vset.pattern.permute.xlu0 0
        %1288 = vperm.xlu0 %1287, %v1254
        %v1289 = vpop.permute.xlu0 %1288
        %1292 = vset.pattern.permute.xlu0 0
        %1293 = vperm.xlu0 %1292, %v1255
        %v1294 = vpop.permute.xlu0 %1293
        %1297 = vset.pattern.permute.xlu0 0
        %1298 = vperm.xlu0 %1297, %v1256
        %v1299 = vpop.permute.xlu0 %1298
        %1302 = vset.pattern.permute.xlu0 0
        %1303 = vperm.xlu0 %1302, %v1257
        %v1304 = vpop.permute.xlu0 %1303
        %1307 = vset.pattern.permute.xlu0 0
        %1308 = vperm.xlu0 %1307, %v1258
        %v1309 = vpop.permute.xlu0 %1308
        %1312 = vset.pattern.permute.xlu0 0
        %1313 = vperm.xlu0 %1312, %v1259
        %v1314 = vpop.permute.xlu0 %1313
        %1317 = vset.pattern.permute.xlu0 0
        %1318 = vperm.xlu0 %1317, %v1260
        %v1319 = vpop.permute.xlu0 %1318
        %1322 = vset.pattern.permute.xlu0 0
        %1323 = vperm.xlu0 %1322, %v1261
        %v1324 = vpop.permute.xlu0 %1323
        %1327 = vset.pattern.permute.xlu0 0
        %1328 = vperm.xlu0 %1327, %v1262
        %v1329 = vpop.permute.xlu0 %1328
        %1332 = vset.pattern.permute.xlu0 0
        %1333 = vperm.xlu0 %1332, %v1263
        %v1334 = vpop.permute.xlu0 %1333
        %1337 = vset.pattern.permute.xlu0 0
        %1338 = vperm.xlu0 %1337, %v1264
        %v1339 = vpop.permute.xlu0 %1338
        %1342 = vset.pattern.permute.xlu0 0
        %1343 = vperm.xlu0 %1342, %v1265
        %v1344 = vpop.permute.xlu0 %1343
        %v1346 = vperm.slane %v1216, 1
        %v1347 = vsub.f32 %v1269, %v1346
        %v1348 = vsub.f32 %v1274, %v1346
        %v1349 = vsub.f32 %v1279, %v1346
        %v1350 = vsub.f32 %v1284, %v1346
        %v1351 = vsub.f32 %v1289, %v1346
        %v1352 = vsub.f32 %v1294, %v1346
        %v1353 = vsub.f32 %v1299, %v1346
        %v1354 = vsub.f32 %v1304, %v1346
        %v1355 = vsub.f32 %v1309, %v1346
        %v1356 = vsub.f32 %v1314, %v1346
        %v1357 = vsub.f32 %v1319, %v1346
        %v1358 = vsub.f32 %v1324, %v1346
        %v1359 = vsub.f32 %v1329, %v1346
        %v1360 = vsub.f32 %v1334, %v1346
        %v1361 = vsub.f32 %v1339, %v1346
        %v1362 = vsub.f32 %v1344, %v1346
        %v1363 = vtanh.pop %v1347
        %v1364 = vtanh.pop %v1348
        %v1365 = vtanh.pop %v1349
        %v1366 = vtanh.pop %v1350
        %v1367 = vtanh.pop %v1351
        %v1368 = vtanh.pop %v1352
        %v1369 = vtanh.pop %v1353
        %v1370 = vtanh.pop %v1354
        %v1371 = vtanh.pop %v1355
        %v1372 = vtanh.pop %v1356
        %v1373 = vtanh.pop %v1357
        %v1374 = vtanh.pop %v1358
        %v1375 = vtanh.pop %v1359
        %v1376 = vtanh.pop %v1360
        %v1377 = vtanh.pop %v1361
        %v1378 = vtanh.pop %v1362
        %s1379 = scalar_lea.vmem %s6, 128
        %v1380 = vld [vmem:[%s1379] sm:$0xff]
        %v1381 = vld [vmem:[%s1379 + $0x8] sm:$0xff]
        %v1382 = vld [vmem:[%s1379 + $0x10] sm:$0xff]
        %v1383 = vld [vmem:[%s1379 + $0x18] sm:$0xff]
        %v1384 = vld [vmem:[%s1379 + $0x20] sm:$0xff]
        %v1385 = vld [vmem:[%s1379 + $0x28] sm:$0xff]
        %v1386 = vld [vmem:[%s1379 + $0x30] sm:$0xff]
        %v1387 = vld [vmem:[%s1379 + $0x38] sm:$0xff]
        %v1388 = vld [vmem:[%s1379 + $0x40] sm:$0xff]
        %v1389 = vld [vmem:[%s1379 + $0x48] sm:$0xff]
        %v1390 = vld [vmem:[%s1379 + $0x50] sm:$0xff]
        %v1391 = vld [vmem:[%s1379 + $0x58] sm:$0xff]
        %v1392 = vld [vmem:[%s1379 + $0x60] sm:$0xff]
        %v1393 = vld [vmem:[%s1379 + $0x68] sm:$0xff]
        %v1394 = vld [vmem:[%s1379 + $0x70] sm:$0xff]
        %v1395 = vld [vmem:[%s1379 + $0x78] sm:$0xff]
        %v1396 = vmul.f32 %v1363, %v1380
        %v1397 = vmul.f32 %v1364, %v1381
        %v1398 = vmul.f32 %v1365, %v1382
        %v1399 = vmul.f32 %v1366, %v1383
        %v1400 = vmul.f32 %v1367, %v1384
        %v1401 = vmul.f32 %v1368, %v1385
        %v1402 = vmul.f32 %v1369, %v1386
        %v1403 = vmul.f32 %v1370, %v1387
        %v1404 = vmul.f32 %v1371, %v1388
        %v1405 = vmul.f32 %v1372, %v1389
        %v1406 = vmul.f32 %v1373, %v1390
        %v1407 = vmul.f32 %v1374, %v1391
        %v1408 = vmul.f32 %v1375, %v1392
        %v1409 = vmul.f32 %v1376, %v1393
        %v1410 = vmul.f32 %v1377, %v1394
        %v1411 = vmul.f32 %v1378, %v1395
        %v1412 = vadd.f32 %v1218, %v1396
        %v1413 = vadd.f32 %v1219, %v1397
        %v1414 = vadd.f32 %v1220, %v1398
        %v1415 = vadd.f32 %v1221, %v1399
        %v1416 = vadd.f32 %v1222, %v1400
        %v1417 = vadd.f32 %v1223, %v1401
        %v1418 = vadd.f32 %v1224, %v1402
        %v1419 = vadd.f32 %v1225, %v1403
        %v1420 = vadd.f32 %v1226, %v1404
        %v1421 = vadd.f32 %v1227, %v1405
        %v1422 = vadd.f32 %v1228, %v1406
        %v1423 = vadd.f32 %v1229, %v1407
        %v1424 = vadd.f32 %v1230, %v1408
        %v1425 = vadd.f32 %v1231, %v1409
        %v1426 = vadd.f32 %v1232, %v1410
        %v1427 = vadd.f32 %v1233, %v1411
        %v1428 = vld [vmem:[%s9] sm:$0xff]
        %v1429 = vld [vmem:[%s9 + $0x8] sm:$0xff]
        %v1430 = vld [vmem:[%s9 + $0x10] sm:$0xff]
        %v1431 = vld [vmem:[%s9 + $0x18] sm:$0xff]
        %v1432 = vld [vmem:[%s9 + $0x20] sm:$0xff]
        %v1433 = vld [vmem:[%s9 + $0x28] sm:$0xff]
        %v1434 = vld [vmem:[%s9 + $0x30] sm:$0xff]
        %v1435 = vld [vmem:[%s9 + $0x38] sm:$0xff]
        %1437 = vset.pattern.permute.xlu0 3
        %1438 = vperm.xlu0 %1437, %v1428
        %v1439 = vpop.permute.xlu0 %1438
        %1442 = vset.pattern.permute.xlu0 3
        %1443 = vperm.xlu0 %1442, %v1429
        %v1444 = vpop.permute.xlu0 %1443
        %1447 = vset.pattern.permute.xlu0 3
        %1448 = vperm.xlu0 %1447, %v1430
        %v1449 = vpop.permute.xlu0 %1448
        %1452 = vset.pattern.permute.xlu0 3
        %1453 = vperm.xlu0 %1452, %v1431
        %v1454 = vpop.permute.xlu0 %1453
        %1457 = vset.pattern.permute.xlu0 3
        %1458 = vperm.xlu0 %1457, %v1432
        %v1459 = vpop.permute.xlu0 %1458
        %1462 = vset.pattern.permute.xlu0 3
        %1463 = vperm.xlu0 %1462, %v1433
        %v1464 = vpop.permute.xlu0 %1463
        %1467 = vset.pattern.permute.xlu0 3
        %1468 = vperm.xlu0 %1467, %v1434
        %v1469 = vpop.permute.xlu0 %1468
        %1472 = vset.pattern.permute.xlu0 3
        %1473 = vperm.xlu0 %1472, %v1435
        %v1474 = vpop.permute.xlu0 %1473
        %1476 = vmatpush.msra.mxu0 %v1427
        %1477 = vmatpush.msra.mxu0 %v1426
        %1478 = vmatpush.msra.mxu0 %v1425
        %1479 = vmatpush.msra.mxu0 %v1424
        %1480 = vmatpush.msra.mxu0 %v1423
        %1481 = vmatpush.msra.mxu0 %v1422
        %1482 = vmatpush.msra.mxu0 %v1421
        %1483 = vmatpush.msra.mxu0 %v1420
        %1484 = vmatpush.msra.mxu0 %v1419
        %1485 = vmatpush.msra.mxu0 %v1418
        %1486 = vmatpush.msra.mxu0 %v1417
        %1487 = vmatpush.msra.mxu0 %v1416
        %1488 = vmatpush.msra.mxu0 %v1415
        %1489 = vmatpush.msra.mxu0 %v1414
        %1490 = vmatpush.msra.mxu0 %v1413
        %1491 = vmatpush.msra.mxu0 %v1412
        %1492 = vmatmul.f32.gmra.mxu0 %v1192
        %v1493 = vpop.f32.mrf.mxu0
        %v1494 = vadd.f32 %v1439, %v1493
        %1495 = vmatmul.f32.gmra.mxu0 %v1195
        %v1496 = vpop.f32.mrf.mxu0
        %v1497 = vadd.f32 %v1444, %v1496
        %1498 = vmatmul.f32.gmra.mxu0 %v1198
        %v1499 = vpop.f32.mrf.mxu0
        %v1500 = vadd.f32 %v1449, %v1499
        %1501 = vmatmul.f32.gmra.mxu0 %v1201
        %v1502 = vpop.f32.mrf.mxu0
        %v1503 = vadd.f32 %v1454, %v1502
        %1504 = vmatmul.f32.gmra.mxu0 %v1204
        %v1505 = vpop.f32.mrf.mxu0
        %v1506 = vadd.f32 %v1459, %v1505
        %1507 = vmatmul.f32.gmra.mxu0 %v1207
        %v1508 = vpop.f32.mrf.mxu0
        %v1509 = vadd.f32 %v1464, %v1508
        %1510 = vmatmul.f32.gmra.mxu0 %v1210
        %v1511 = vpop.f32.mrf.mxu0
        %v1512 = vadd.f32 %v1469, %v1511
        %1513 = vmatmul.f32.gmra.mxu0 %v1213
        %v1514 = vpop.f32.mrf.mxu0
        %v1515 = vadd.f32 %v1474, %v1514
        %1516 = vdwg.mxu0
        %v1517 = vld [vmem:[%s2] sm:$0xff]
        %v1518 = vld [vmem:[%s2 + $0x8] sm:$0xff]
        %v1519 = vld [vmem:[%s2 + $0x10] sm:$0xff]
        %v1520 = vld [vmem:[%s2 + $0x18] sm:$0xff]
        %v1521 = vld [vmem:[%s2 + $0x20] sm:$0xff]
        %v1522 = vld [vmem:[%s2 + $0x28] sm:$0xff]
        %v1523 = vld [vmem:[%s2 + $0x30] sm:$0xff]
        %v1524 = vld [vmem:[%s2 + $0x38] sm:$0xff]
        %v1525 = vld [vmem:[%s2 + $0x40] sm:$0xff]
        %v1526 = vld [vmem:[%s2 + $0x48] sm:$0xff]
        %v1527 = vld [vmem:[%s2 + $0x50] sm:$0xff]
        %v1528 = vld [vmem:[%s2 + $0x58] sm:$0xff]
        %v1529 = vld [vmem:[%s2 + $0x60] sm:$0xff]
        %v1530 = vld [vmem:[%s2 + $0x68] sm:$0xff]
        %v1531 = vld [vmem:[%s2 + $0x70] sm:$0xff]
        %v1532 = vld [vmem:[%s2 + $0x78] sm:$0xff]
        %v1533 = vld [vmem:[%s10 + $0x1] sm:$0x1]
        %v1535 = vperm.slane %v1533, 0
        %1537 = vmatpush.msra.mxu0 %v1532
        %1538 = vmatpush.msra.mxu0 %v1531
        %1539 = vmatpush.msra.mxu0 %v1530
        %1540 = vmatpush.msra.mxu0 %v1529
        %1541 = vmatpush.msra.mxu0 %v1528
        %1542 = vmatpush.msra.mxu0 %v1527
        %1543 = vmatpush.msra.mxu0 %v1526
        %1544 = vmatpush.msra.mxu0 %v1525
        %1545 = vmatpush.msra.mxu0 %v1524
        %1546 = vmatpush.msra.mxu0 %v1523
        %1547 = vmatpush.msra.mxu0 %v1522
        %1548 = vmatpush.msra.mxu0 %v1521
        %1549 = vmatpush.msra.mxu0 %v1520
        %1550 = vmatpush.msra.mxu0 %v1519
        %1551 = vmatpush.msra.mxu0 %v1518
        %1552 = vmatpush.msra.mxu0 %v1517
        %1553 = vmatmul.f32.gmra.mxu0 %v1494
        %v1554 = vpop.f32.mrf.mxu0
        %v1555 = vadd.f32 %v1535, %v1554
        %1556 = vmatmul.f32.gmra.mxu0 %v1497
        %v1557 = vpop.f32.mrf.mxu0
        %v1558 = vadd.f32 %v1535, %v1557
        %1559 = vmatmul.f32.gmra.mxu0 %v1500
        %v1560 = vpop.f32.mrf.mxu0
        %v1561 = vadd.f32 %v1535, %v1560
        %1562 = vmatmul.f32.gmra.mxu0 %v1503
        %v1563 = vpop.f32.mrf.mxu0
        %v1564 = vadd.f32 %v1535, %v1563
        %1565 = vmatmul.f32.gmra.mxu0 %v1506
        %v1566 = vpop.f32.mrf.mxu0
        %v1567 = vadd.f32 %v1535, %v1566
        %1568 = vmatmul.f32.gmra.mxu0 %v1509
        %v1569 = vpop.f32.mrf.mxu0
        %v1570 = vadd.f32 %v1535, %v1569
        %1571 = vmatmul.f32.gmra.mxu0 %v1512
        %v1572 = vpop.f32.mrf.mxu0
        %v1573 = vadd.f32 %v1535, %v1572
        %1574 = vmatmul.f32.gmra.mxu0 %v1515
        %v1575 = vpop.f32.mrf.mxu0
        %v1576 = vadd.f32 %v1535, %v1575
        %1577 = vdwg.mxu0
        %s1578 = scalar_lea.vmem %s5, 72
        %v1579 = vld [vmem:[%s1578] sm:$0xff]
        %v1580 = vld [vmem:[%s1578 + $0x8] sm:$0xff]
        %v1581 = vld [vmem:[%s1578 + $0x10] sm:$0xff]
        %v1582 = vld [vmem:[%s1578 + $0x18] sm:$0xff]
        %v1583 = vld [vmem:[%s1578 + $0x20] sm:$0xff]
        %v1584 = vld [vmem:[%s1578 + $0x28] sm:$0xff]
        %v1585 = vld [vmem:[%s1578 + $0x30] sm:$0xff]
        %v1586 = vld [vmem:[%s1578 + $0x38] sm:$0xff]
        %v1587 = vld [vmem:[%s1578 + $0x40] sm:$0x3]
        %1588 = vset.pattern.permute.xlu0 1
        %1589 = vperm.xlu0 %1588, %v1092
        %v1590 = vpop.permute.xlu0 %1589
        %1592 = vset.pattern.permute.xlu0 1
        %1593 = vperm.xlu0 %1592, %v1093
        %v1594 = vpop.permute.xlu0 %1593
        %1596 = vset.pattern.permute.xlu0 1
        %1597 = vperm.xlu0 %1596, %v1094
        %v1598 = vpop.permute.xlu0 %1597
        %1600 = vset.pattern.permute.xlu0 1
        %1601 = vperm.xlu0 %1600, %v1095
        %v1602 = vpop.permute.xlu0 %1601
        %1604 = vset.pattern.permute.xlu0 1
        %1605 = vperm.xlu0 %1604, %v1096
        %v1606 = vpop.permute.xlu0 %1605
        %1608 = vset.pattern.permute.xlu0 1
        %1609 = vperm.xlu0 %1608, %v1097
        %v1610 = vpop.permute.xlu0 %1609
        %1612 = vset.pattern.permute.xlu0 1
        %1613 = vperm.xlu0 %1612, %v1098
        %v1614 = vpop.permute.xlu0 %1613
        %1616 = vset.pattern.permute.xlu0 1
        %1617 = vperm.xlu0 %1616, %v1099
        %v1618 = vpop.permute.xlu0 %1617
        %1620 = vset.pattern.permute.xlu0 1
        %1621 = vperm.xlu0 %1620, %v1100
        %v1622 = vpop.permute.xlu0 %1621
        %v1625 = vsel %vm1146, %v1579, 0
        %v1628 = vsel %vm1146, %v1580, 0
        %v1631 = vsel %vm1146, %v1581, 0
        %v1634 = vsel %vm1146, %v1582, 0
        %v1637 = vsel %vm1146, %v1583, 0
        %v1640 = vsel %vm1146, %v1584, 0
        %v1643 = vsel %vm1146, %v1585, 0
        %v1646 = vsel %vm1146, %v1586, 0
        %v1649 = vsel %vm1146, %v1587, 0
        %1651 = vmatpush.msra.mxu0 0.0
        %1652 = vmatpush.msra.mxu0 0.0
        %1653 = vmatpush.msra.mxu0 0.0
        %1654 = vmatpush.msra.mxu0 0.0
        %1655 = vmatpush.msra.mxu0 0.0
        %1656 = vmatpush.msra.mxu0 0.0
        %1657 = vmatpush.msra.mxu0 0.0
        %1658 = vmatpush.msra.mxu0 0.0
        %1659 = vmatpush.msra.mxu0 %v1576
        %1660 = vmatpush.msra.mxu0 %v1573
        %1661 = vmatpush.msra.mxu0 %v1570
        %1662 = vmatpush.msra.mxu0 %v1567
        %1663 = vmatpush.msra.mxu0 %v1564
        %1664 = vmatpush.msra.mxu0 %v1561
        %1665 = vmatpush.msra.mxu0 %v1558
        %1666 = vmatpush.msra.mxu0 %v1555
        %1667 = vmatmul.f32.gmra.mxu0 %v1625
        %v1668 = vpop.f32.mrf.mxu0
        %v1669 = vadd.f32 %v1590, %v1668
        %1670 = vmatmul.f32.gmra.mxu0 %v1628
        %v1671 = vpop.f32.mrf.mxu0
        %v1672 = vadd.f32 %v1594, %v1671
        %1673 = vmatmul.f32.gmra.mxu0 %v1631
        %v1674 = vpop.f32.mrf.mxu0
        %v1675 = vadd.f32 %v1598, %v1674
        %1676 = vmatmul.f32.gmra.mxu0 %v1634
        %v1677 = vpop.f32.mrf.mxu0
        %v1678 = vadd.f32 %v1602, %v1677
        %1679 = vmatmul.f32.gmra.mxu0 %v1637
        %v1680 = vpop.f32.mrf.mxu0
        %v1681 = vadd.f32 %v1606, %v1680
        %1682 = vmatmul.f32.gmra.mxu0 %v1640
        %v1683 = vpop.f32.mrf.mxu0
        %v1684 = vadd.f32 %v1610, %v1683
        %1685 = vmatmul.f32.gmra.mxu0 %v1643
        %v1686 = vpop.f32.mrf.mxu0
        %v1687 = vadd.f32 %v1614, %v1686
        %1688 = vmatmul.f32.gmra.mxu0 %v1646
        %v1689 = vpop.f32.mrf.mxu0
        %v1690 = vadd.f32 %v1618, %v1689
        %1691 = vmatmul.f32.gmra.mxu0 %v1649
        %v1692 = vpop.f32.mrf.mxu0
        %v1693 = vadd.f32 %v1622, %v1692
        %1694 = vdwg.mxu0
        %v1695 = vld [vmem:[%s7] sm:$0xff]
        %v1696 = vld [vmem:[%s7 + $0x8] sm:$0xff]
        %v1697 = vld [vmem:[%s7 + $0x10] sm:$0xff]
        %v1698 = vld [vmem:[%s7 + $0x18] sm:$0xff]
        %v1699 = vld [vmem:[%s7 + $0x20] sm:$0xff]
        %v1700 = vld [vmem:[%s7 + $0x28] sm:$0xff]
        %v1701 = vld [vmem:[%s7 + $0x30] sm:$0xff]
        %v1702 = vld [vmem:[%s7 + $0x38] sm:$0xff]
        %1703 = vxpose.xlu0.b32.start [1/16] %v1693, 128
        %1704 = vxpose.xlu0.b32.cont [2/16] 0.0, 128
        %1705 = vxpose.xlu0.b32.cont [3/16] 0.0, 128
        %1706 = vxpose.xlu0.b32.cont [4/16] 0.0, 128
        %1707 = vxpose.xlu0.b32.cont [5/16] 0.0, 128
        %1708 = vxpose.xlu0.b32.cont [6/16] 0.0, 128
        %1709 = vxpose.xlu0.b32.cont [7/16] 0.0, 128
        %1710 = vxpose.xlu0.b32.cont [8/16] 0.0, 128
        %1711 = vxpose.xlu0.b32.cont [9/16] 0.0, 128
        %1712 = vxpose.xlu0.b32.cont [10/16] 0.0, 128
        %1713 = vxpose.xlu0.b32.cont [11/16] 0.0, 128
        %1714 = vxpose.xlu0.b32.cont [12/16] 0.0, 128
        %1715 = vxpose.xlu0.b32.cont [13/16] 0.0, 128
        %1716 = vxpose.xlu0.b32.cont [14/16] 0.0, 128
        %1717 = vxpose.xlu0.b32.cont [15/16] 0.0, 128
        %1718 = vxpose.xlu0.b32.end [16/16] 0.0, 128
        %v1719 = vpop.trf.xlu0
        %v1720 = vpop.trf.xlu0
        %v1721 = vpop.trf.xlu0
        %v1722 = vpop.trf.xlu0
        %v1723 = vpop.trf.xlu0
        %v1724 = vpop.trf.xlu0
        %v1725 = vpop.trf.xlu0
        %v1726 = vpop.trf.xlu0
        %v1727 = vpop.trf.xlu0
        %v1728 = vpop.trf.xlu0
        %v1729 = vpop.trf.xlu0
        %v1730 = vpop.trf.xlu0
        %v1731 = vpop.trf.xlu0
        %v1732 = vpop.trf.xlu0
        %v1733 = vpop.trf.xlu0
        %v1734 = vpop.trf.xlu0
        %1736 = vset.pattern.permute.xlu0 0
        %1737 = vperm.xlu0 %1736, %v1719
        %v1738 = vpop.permute.xlu0 %1737
        %1741 = vset.pattern.permute.xlu0 0
        %1742 = vperm.xlu0 %1741, %v1720
        %v1743 = vpop.permute.xlu0 %1742
        %1746 = vset.pattern.permute.xlu0 0
        %1747 = vperm.xlu0 %1746, %v1721
        %v1748 = vpop.permute.xlu0 %1747
        %1751 = vset.pattern.permute.xlu0 0
        %1752 = vperm.xlu0 %1751, %v1722
        %v1753 = vpop.permute.xlu0 %1752
        %1756 = vset.pattern.permute.xlu0 0
        %1757 = vperm.xlu0 %1756, %v1723
        %v1758 = vpop.permute.xlu0 %1757
        %1761 = vset.pattern.permute.xlu0 0
        %1762 = vperm.xlu0 %1761, %v1724
        %v1763 = vpop.permute.xlu0 %1762
        %1766 = vset.pattern.permute.xlu0 0
        %1767 = vperm.xlu0 %1766, %v1725
        %v1768 = vpop.permute.xlu0 %1767
        %1771 = vset.pattern.permute.xlu0 0
        %1772 = vperm.xlu0 %1771, %v1726
        %v1773 = vpop.permute.xlu0 %1772
        %v1775 = vperm.slane %v1693, 1
        %v1776 = vsub.f32 %v1738, %v1775
        %v1777 = vsub.f32 %v1743, %v1775
        %v1778 = vsub.f32 %v1748, %v1775
        %v1779 = vsub.f32 %v1753, %v1775
        %v1780 = vsub.f32 %v1758, %v1775
        %v1781 = vsub.f32 %v1763, %v1775
        %v1782 = vsub.f32 %v1768, %v1775
        %v1783 = vsub.f32 %v1773, %v1775
        %v1784 = vtanh.pop %v1776
        %v1785 = vtanh.pop %v1777
        %v1786 = vtanh.pop %v1778
        %v1787 = vtanh.pop %v1779
        %v1788 = vtanh.pop %v1780
        %v1789 = vtanh.pop %v1781
        %v1790 = vtanh.pop %v1782
        %v1791 = vtanh.pop %v1783
        %s1792 = scalar_lea.vmem %s7, 64
        %v1793 = vld [vmem:[%s1792] sm:$0xff]
        %v1794 = vld [vmem:[%s1792 + $0x8] sm:$0xff]
        %v1795 = vld [vmem:[%s1792 + $0x10] sm:$0xff]
        %v1796 = vld [vmem:[%s1792 + $0x18] sm:$0xff]
        %v1797 = vld [vmem:[%s1792 + $0x20] sm:$0xff]
        %v1798 = vld [vmem:[%s1792 + $0x28] sm:$0xff]
        %v1799 = vld [vmem:[%s1792 + $0x30] sm:$0xff]
        %v1800 = vld [vmem:[%s1792 + $0x38] sm:$0xff]
        %v1801 = vmul.f32 %v1784, %v1793
        %v1802 = vmul.f32 %v1785, %v1794
        %v1803 = vmul.f32 %v1786, %v1795
        %v1804 = vmul.f32 %v1787, %v1796
        %v1805 = vmul.f32 %v1788, %v1797
        %v1806 = vmul.f32 %v1789, %v1798
        %v1807 = vmul.f32 %v1790, %v1799
        %v1808 = vmul.f32 %v1791, %v1800
        %v1809 = vadd.f32 %v1695, %v1801
        %v1810 = vadd.f32 %v1696, %v1802
        %v1811 = vadd.f32 %v1697, %v1803
        %v1812 = vadd.f32 %v1698, %v1804
        %v1813 = vadd.f32 %v1699, %v1805
        %v1814 = vadd.f32 %v1700, %v1806
        %v1815 = vadd.f32 %v1701, %v1807
        %v1816 = vadd.f32 %v1702, %v1808
        %1817 = vset.pattern.permute.xlu0 4
        %1818 = vperm.xlu0 %1817, %v1428
        %v1819 = vpop.permute.xlu0 %1818
        %1821 = vset.pattern.permute.xlu0 4
        %1822 = vperm.xlu0 %1821, %v1429
        %v1823 = vpop.permute.xlu0 %1822
        %1825 = vset.pattern.permute.xlu0 4
        %1826 = vperm.xlu0 %1825, %v1430
        %v1827 = vpop.permute.xlu0 %1826
        %1829 = vset.pattern.permute.xlu0 4
        %1830 = vperm.xlu0 %1829, %v1431
        %v1831 = vpop.permute.xlu0 %1830
        %1833 = vset.pattern.permute.xlu0 4
        %1834 = vperm.xlu0 %1833, %v1432
        %v1835 = vpop.permute.xlu0 %1834
        %1837 = vset.pattern.permute.xlu0 4
        %1838 = vperm.xlu0 %1837, %v1433
        %v1839 = vpop.permute.xlu0 %1838
        %1841 = vset.pattern.permute.xlu0 4
        %1842 = vperm.xlu0 %1841, %v1434
        %v1843 = vpop.permute.xlu0 %1842
        %1845 = vset.pattern.permute.xlu0 4
        %1846 = vperm.xlu0 %1845, %v1435
        %v1847 = vpop.permute.xlu0 %1846
        %v1850 = vsel %vm1146, %v1669, 0
        %v1853 = vsel %vm1146, %v1672, 0
        %v1856 = vsel %vm1146, %v1675, 0
        %v1859 = vsel %vm1146, %v1678, 0
        %v1862 = vsel %vm1146, %v1681, 0
        %v1865 = vsel %vm1146, %v1684, 0
        %v1868 = vsel %vm1146, %v1687, 0
        %v1871 = vsel %vm1146, %v1690, 0
        %1873 = vmatpush.msra.mxu0 0.0
        %1874 = vmatpush.msra.mxu0 0.0
        %1875 = vmatpush.msra.mxu0 0.0
        %1876 = vmatpush.msra.mxu0 0.0
        %1877 = vmatpush.msra.mxu0 0.0
        %1878 = vmatpush.msra.mxu0 0.0
        %1879 = vmatpush.msra.mxu0 0.0
        %1880 = vmatpush.msra.mxu0 0.0
        %1881 = vmatpush.msra.mxu0 %v1816
        %1882 = vmatpush.msra.mxu0 %v1815
        %1883 = vmatpush.msra.mxu0 %v1814
        %1884 = vmatpush.msra.mxu0 %v1813
        %1885 = vmatpush.msra.mxu0 %v1812
        %1886 = vmatpush.msra.mxu0 %v1811
        %1887 = vmatpush.msra.mxu0 %v1810
        %1888 = vmatpush.msra.mxu0 %v1809
        %1889 = vmatmul.f32.gmra.mxu0 %v1850
        %v1890 = vpop.f32.mrf.mxu0
        %v1891 = vadd.f32 %v1819, %v1890
        %1892 = vmatmul.f32.gmra.mxu0 %v1853
        %v1893 = vpop.f32.mrf.mxu0
        %v1894 = vadd.f32 %v1823, %v1893
        %1895 = vmatmul.f32.gmra.mxu0 %v1856
        %v1896 = vpop.f32.mrf.mxu0
        %v1897 = vadd.f32 %v1827, %v1896
        %1898 = vmatmul.f32.gmra.mxu0 %v1859
        %v1899 = vpop.f32.mrf.mxu0
        %v1900 = vadd.f32 %v1831, %v1899
        %1901 = vmatmul.f32.gmra.mxu0 %v1862
        %v1902 = vpop.f32.mrf.mxu0
        %v1903 = vadd.f32 %v1835, %v1902
        %1904 = vmatmul.f32.gmra.mxu0 %v1865
        %v1905 = vpop.f32.mrf.mxu0
        %v1906 = vadd.f32 %v1839, %v1905
        %1907 = vmatmul.f32.gmra.mxu0 %v1868
        %v1908 = vpop.f32.mrf.mxu0
        %v1909 = vadd.f32 %v1843, %v1908
        %1910 = vmatmul.f32.gmra.mxu0 %v1871
        %v1911 = vpop.f32.mrf.mxu0
        %v1912 = vadd.f32 %v1847, %v1911
        %1913 = vdwg.mxu0
        %v1914 = vld [vmem:[%s3] sm:$0xff]
        %v1915 = vld [vmem:[%s3 + $0x8] sm:$0xff]
        %v1916 = vld [vmem:[%s3 + $0x10] sm:$0xff]
        %v1917 = vld [vmem:[%s3 + $0x18] sm:$0xff]
        %v1918 = vld [vmem:[%s3 + $0x20] sm:$0xff]
        %v1919 = vld [vmem:[%s3 + $0x28] sm:$0xff]
        %v1920 = vld [vmem:[%s3 + $0x30] sm:$0xff]
        %v1921 = vld [vmem:[%s3 + $0x38] sm:$0xff]
        %v1922 = vld [vmem:[%s10 + $0x2] sm:$0x1]
        %v1924 = vperm.slane %v1922, 0
        %v1927 = vsel %vm1146, %v1891, 0
        %v1930 = vsel %vm1146, %v1894, 0
        %v1933 = vsel %vm1146, %v1897, 0
        %v1936 = vsel %vm1146, %v1900, 0
        %v1939 = vsel %vm1146, %v1903, 0
        %v1942 = vsel %vm1146, %v1906, 0
        %v1945 = vsel %vm1146, %v1909, 0
        %v1948 = vsel %vm1146, %v1912, 0
        %1950 = vmatpush.msra.mxu0 0.0
        %1951 = vmatpush.msra.mxu0 0.0
        %1952 = vmatpush.msra.mxu0 0.0
        %1953 = vmatpush.msra.mxu0 0.0
        %1954 = vmatpush.msra.mxu0 0.0
        %1955 = vmatpush.msra.mxu0 0.0
        %1956 = vmatpush.msra.mxu0 0.0
        %1957 = vmatpush.msra.mxu0 0.0
        %1958 = vmatpush.msra.mxu0 %v1921
        %1959 = vmatpush.msra.mxu0 %v1920
        %1960 = vmatpush.msra.mxu0 %v1919
        %1961 = vmatpush.msra.mxu0 %v1918
        %1962 = vmatpush.msra.mxu0 %v1917
        %1963 = vmatpush.msra.mxu0 %v1916
        %1964 = vmatpush.msra.mxu0 %v1915
        %1965 = vmatpush.msra.mxu0 %v1914
        %1966 = vmatmul.f32.gmra.mxu0 %v1927
        %v1967 = vpop.f32.mrf.mxu0
        %v1968 = vadd.f32 %v1924, %v1967
        %1969 = vmatmul.f32.gmra.mxu0 %v1930
        %v1970 = vpop.f32.mrf.mxu0
        %v1971 = vadd.f32 %v1924, %v1970
        %1972 = vmatmul.f32.gmra.mxu0 %v1933
        %v1973 = vpop.f32.mrf.mxu0
        %v1974 = vadd.f32 %v1924, %v1973
        %1975 = vmatmul.f32.gmra.mxu0 %v1936
        %v1976 = vpop.f32.mrf.mxu0
        %v1977 = vadd.f32 %v1924, %v1976
        %1978 = vmatmul.f32.gmra.mxu0 %v1939
        %v1979 = vpop.f32.mrf.mxu0
        %v1980 = vadd.f32 %v1924, %v1979
        %1981 = vmatmul.f32.gmra.mxu0 %v1942
        %v1982 = vpop.f32.mrf.mxu0
        %v1983 = vadd.f32 %v1924, %v1982
        %1984 = vmatmul.f32.gmra.mxu0 %v1945
        %v1985 = vpop.f32.mrf.mxu0
        %v1986 = vadd.f32 %v1924, %v1985
        %1987 = vmatmul.f32.gmra.mxu0 %v1948
        %v1988 = vpop.f32.mrf.mxu0
        %v1989 = vadd.f32 %v1924, %v1988
        %1990 = vdwg.mxu0
        %s1991 = scalar_lea.vmem %s5, 144
        %v1992 = vld [vmem:[%s1991] sm:$0xff]
        %v1993 = vld [vmem:[%s1991 + $0x8] sm:$0xff]
        %v1994 = vld [vmem:[%s1991 + $0x10] sm:$0xff]
        %v1995 = vld [vmem:[%s1991 + $0x18] sm:$0xff]
        %v1996 = vld [vmem:[%s1991 + $0x20] sm:$0xff]
        %v1997 = vld [vmem:[%s1991 + $0x28] sm:$0xff]
        %v1998 = vld [vmem:[%s1991 + $0x30] sm:$0xff]
        %v1999 = vld [vmem:[%s1991 + $0x38] sm:$0xff]
        %v2000 = vld [vmem:[%s1991 + $0x40] sm:$0x3]
        %2001 = vset.pattern.permute.xlu0 2
        %2002 = vperm.xlu0 %2001, %v1092
        %v2003 = vpop.permute.xlu0 %2002
        %2005 = vset.pattern.permute.xlu0 2
        %2006 = vperm.xlu0 %2005, %v1093
        %v2007 = vpop.permute.xlu0 %2006
        %2009 = vset.pattern.permute.xlu0 2
        %2010 = vperm.xlu0 %2009, %v1094
        %v2011 = vpop.permute.xlu0 %2010
        %2013 = vset.pattern.permute.xlu0 2
        %2014 = vperm.xlu0 %2013, %v1095
        %v2015 = vpop.permute.xlu0 %2014
        %2017 = vset.pattern.permute.xlu0 2
        %2018 = vperm.xlu0 %2017, %v1096
        %v2019 = vpop.permute.xlu0 %2018
        %2021 = vset.pattern.permute.xlu0 2
        %2022 = vperm.xlu0 %2021, %v1097
        %v2023 = vpop.permute.xlu0 %2022
        %2025 = vset.pattern.permute.xlu0 2
        %2026 = vperm.xlu0 %2025, %v1098
        %v2027 = vpop.permute.xlu0 %2026
        %2029 = vset.pattern.permute.xlu0 2
        %2030 = vperm.xlu0 %2029, %v1099
        %v2031 = vpop.permute.xlu0 %2030
        %2033 = vset.pattern.permute.xlu0 2
        %2034 = vperm.xlu0 %2033, %v1100
        %v2035 = vpop.permute.xlu0 %2034
        %v2038 = vsel %vm1146, %v1992, 0
        %v2041 = vsel %vm1146, %v1993, 0
        %v2044 = vsel %vm1146, %v1994, 0
        %v2047 = vsel %vm1146, %v1995, 0
        %v2050 = vsel %vm1146, %v1996, 0
        %v2053 = vsel %vm1146, %v1997, 0
        %v2056 = vsel %vm1146, %v1998, 0
        %v2059 = vsel %vm1146, %v1999, 0
        %v2062 = vsel %vm1146, %v2000, 0
        %2064 = vmatpush.msra.mxu0 0.0
        %2065 = vmatpush.msra.mxu0 0.0
        %2066 = vmatpush.msra.mxu0 0.0
        %2067 = vmatpush.msra.mxu0 0.0
        %2068 = vmatpush.msra.mxu0 0.0
        %2069 = vmatpush.msra.mxu0 0.0
        %2070 = vmatpush.msra.mxu0 0.0
        %2071 = vmatpush.msra.mxu0 0.0
        %2072 = vmatpush.msra.mxu0 %v1989
        %2073 = vmatpush.msra.mxu0 %v1986
        %2074 = vmatpush.msra.mxu0 %v1983
        %2075 = vmatpush.msra.mxu0 %v1980
        %2076 = vmatpush.msra.mxu0 %v1977
        %2077 = vmatpush.msra.mxu0 %v1974
        %2078 = vmatpush.msra.mxu0 %v1971
        %2079 = vmatpush.msra.mxu0 %v1968
        %2080 = vmatmul.f32.gmra.mxu0 %v2038
        %v2081 = vpop.f32.mrf.mxu0
        %v2082 = vadd.f32 %v2003, %v2081
        %2083 = vmatmul.f32.gmra.mxu0 %v2041
        %v2084 = vpop.f32.mrf.mxu0
        %v2085 = vadd.f32 %v2007, %v2084
        %2086 = vmatmul.f32.gmra.mxu0 %v2044
        %v2087 = vpop.f32.mrf.mxu0
        %v2088 = vadd.f32 %v2011, %v2087
        %2089 = vmatmul.f32.gmra.mxu0 %v2047
        %v2090 = vpop.f32.mrf.mxu0
        %v2091 = vadd.f32 %v2015, %v2090
        %2092 = vmatmul.f32.gmra.mxu0 %v2050
        %v2093 = vpop.f32.mrf.mxu0
        %v2094 = vadd.f32 %v2019, %v2093
        %2095 = vmatmul.f32.gmra.mxu0 %v2053
        %v2096 = vpop.f32.mrf.mxu0
        %v2097 = vadd.f32 %v2023, %v2096
        %2098 = vmatmul.f32.gmra.mxu0 %v2056
        %v2099 = vpop.f32.mrf.mxu0
        %v2100 = vadd.f32 %v2027, %v2099
        %2101 = vmatmul.f32.gmra.mxu0 %v2059
        %v2102 = vpop.f32.mrf.mxu0
        %v2103 = vadd.f32 %v2031, %v2102
        %2104 = vmatmul.f32.gmra.mxu0 %v2062
        %v2105 = vpop.f32.mrf.mxu0
        %v2106 = vadd.f32 %v2035, %v2105
        %2107 = vdwg.mxu0
        %v2108 = vld [vmem:[%s8] sm:$0xff]
        %v2109 = vld [vmem:[%s8 + $0x8] sm:$0xff]
        %v2110 = vld [vmem:[%s8 + $0x10] sm:$0xff]
        %v2111 = vld [vmem:[%s8 + $0x18] sm:$0xff]
        %2112 = vxpose.xlu0.b32.start [1/16] %v2106, 128
        %2113 = vxpose.xlu0.b32.cont [2/16] 0.0, 128
        %2114 = vxpose.xlu0.b32.cont [3/16] 0.0, 128
        %2115 = vxpose.xlu0.b32.cont [4/16] 0.0, 128
        %2116 = vxpose.xlu0.b32.cont [5/16] 0.0, 128
        %2117 = vxpose.xlu0.b32.cont [6/16] 0.0, 128
        %2118 = vxpose.xlu0.b32.cont [7/16] 0.0, 128
        %2119 = vxpose.xlu0.b32.cont [8/16] 0.0, 128
        %2120 = vxpose.xlu0.b32.cont [9/16] 0.0, 128
        %2121 = vxpose.xlu0.b32.cont [10/16] 0.0, 128
        %2122 = vxpose.xlu0.b32.cont [11/16] 0.0, 128
        %2123 = vxpose.xlu0.b32.cont [12/16] 0.0, 128
        %2124 = vxpose.xlu0.b32.cont [13/16] 0.0, 128
        %2125 = vxpose.xlu0.b32.cont [14/16] 0.0, 128
        %2126 = vxpose.xlu0.b32.cont [15/16] 0.0, 128
        %2127 = vxpose.xlu0.b32.end [16/16] 0.0, 128
        %v2128 = vpop.trf.xlu0
        %v2129 = vpop.trf.xlu0
        %v2130 = vpop.trf.xlu0
        %v2131 = vpop.trf.xlu0
        %v2132 = vpop.trf.xlu0
        %v2133 = vpop.trf.xlu0
        %v2134 = vpop.trf.xlu0
        %v2135 = vpop.trf.xlu0
        %v2136 = vpop.trf.xlu0
        %v2137 = vpop.trf.xlu0
        %v2138 = vpop.trf.xlu0
        %v2139 = vpop.trf.xlu0
        %v2140 = vpop.trf.xlu0
        %v2141 = vpop.trf.xlu0
        %v2142 = vpop.trf.xlu0
        %v2143 = vpop.trf.xlu0
        %2145 = vset.pattern.permute.xlu0 0
        %2146 = vperm.xlu0 %2145, %v2128
        %v2147 = vpop.permute.xlu0 %2146
        %2150 = vset.pattern.permute.xlu0 0
        %2151 = vperm.xlu0 %2150, %v2129
        %v2152 = vpop.permute.xlu0 %2151
        %2155 = vset.pattern.permute.xlu0 0
        %2156 = vperm.xlu0 %2155, %v2130
        %v2157 = vpop.permute.xlu0 %2156
        %2160 = vset.pattern.permute.xlu0 0
        %2161 = vperm.xlu0 %2160, %v2131
        %v2162 = vpop.permute.xlu0 %2161
        %v2164 = vperm.slane %v2106, 1
        %v2165 = vsub.f32 %v2147, %v2164
        %v2166 = vsub.f32 %v2152, %v2164
        %v2167 = vsub.f32 %v2157, %v2164
        %v2168 = vsub.f32 %v2162, %v2164
        %v2169 = vtanh.pop %v2165
        %v2170 = vtanh.pop %v2166
        %v2171 = vtanh.pop %v2167
        %v2172 = vtanh.pop %v2168
        %s2173 = scalar_lea.vmem %s8, 32
        %v2174 = vld [vmem:[%s2173] sm:$0xff]
        %v2175 = vld [vmem:[%s2173 + $0x8] sm:$0xff]
        %v2176 = vld [vmem:[%s2173 + $0x10] sm:$0xff]
        %v2177 = vld [vmem:[%s2173 + $0x18] sm:$0xff]
        %v2178 = vmul.f32 %v2169, %v2174
        %v2179 = vmul.f32 %v2170, %v2175
        %v2180 = vmul.f32 %v2171, %v2176
        %v2181 = vmul.f32 %v2172, %v2177
        %v2182 = vadd.f32 %v2108, %v2178
        %v2183 = vadd.f32 %v2109, %v2179
        %v2184 = vadd.f32 %v2110, %v2180
        %v2185 = vadd.f32 %v2111, %v2181
        %2186 = vset.pattern.permute.xlu0 5
        %2187 = vperm.xlu0 %2186, %v1428
        %v2188 = vpop.permute.xlu0 %2187
        %2190 = vset.pattern.permute.xlu0 5
        %2191 = vperm.xlu0 %2190, %v1429
        %v2192 = vpop.permute.xlu0 %2191
        %2194 = vset.pattern.permute.xlu0 5
        %2195 = vperm.xlu0 %2194, %v1430
        %v2196 = vpop.permute.xlu0 %2195
        %2198 = vset.pattern.permute.xlu0 5
        %2199 = vperm.xlu0 %2198, %v1431
        %v2200 = vpop.permute.xlu0 %2199
        %2202 = vset.pattern.permute.xlu0 5
        %2203 = vperm.xlu0 %2202, %v1432
        %v2204 = vpop.permute.xlu0 %2203
        %2206 = vset.pattern.permute.xlu0 5
        %2207 = vperm.xlu0 %2206, %v1433
        %v2208 = vpop.permute.xlu0 %2207
        %2210 = vset.pattern.permute.xlu0 5
        %2211 = vperm.xlu0 %2210, %v1434
        %v2212 = vpop.permute.xlu0 %2211
        %2214 = vset.pattern.permute.xlu0 5
        %2215 = vperm.xlu0 %2214, %v1435
        %v2216 = vpop.permute.xlu0 %2215
        %vm2218 = vcmask 261120
        %v2220 = vsel %vm2218, %v2082, 0
        %v2223 = vsel %vm2218, %v2085, 0
        %v2226 = vsel %vm2218, %v2088, 0
        %v2229 = vsel %vm2218, %v2091, 0
        %v2232 = vsel %vm2218, %v2094, 0
        %v2235 = vsel %vm2218, %v2097, 0
        %v2238 = vsel %vm2218, %v2100, 0
        %v2241 = vsel %vm2218, %v2103, 0
        %2243 = vmatpush.msra.mxu0 0.0
        %2244 = vmatpush.msra.mxu0 0.0
        %2245 = vmatpush.msra.mxu0 0.0
        %2246 = vmatpush.msra.mxu0 0.0
        %2247 = vmatpush.msra.mxu0 0.0
        %2248 = vmatpush.msra.mxu0 0.0
        %2249 = vmatpush.msra.mxu0 0.0
        %2250 = vmatpush.msra.mxu0 0.0
        %2251 = vmatpush.msra.mxu0 0.0
        %2252 = vmatpush.msra.mxu0 0.0
        %2253 = vmatpush.msra.mxu0 0.0
        %2254 = vmatpush.msra.mxu0 0.0
        %2255 = vmatpush.msra.mxu0 %v2185
        %2256 = vmatpush.msra.mxu0 %v2184
        %2257 = vmatpush.msra.mxu0 %v2183
        %2258 = vmatpush.msra.mxu0 %v2182
        %2259 = vmatmul.f32.gmra.mxu0 %v2220
        %v2260 = vpop.f32.mrf.mxu0
        %v2261 = vadd.f32 %v2188, %v2260
        %2262 = vmatmul.f32.gmra.mxu0 %v2223
        %v2263 = vpop.f32.mrf.mxu0
        %v2264 = vadd.f32 %v2192, %v2263
        %2265 = vmatmul.f32.gmra.mxu0 %v2226
        %v2266 = vpop.f32.mrf.mxu0
        %v2267 = vadd.f32 %v2196, %v2266
        %2268 = vmatmul.f32.gmra.mxu0 %v2229
        %v2269 = vpop.f32.mrf.mxu0
        %v2270 = vadd.f32 %v2200, %v2269
        %2271 = vmatmul.f32.gmra.mxu0 %v2232
        %v2272 = vpop.f32.mrf.mxu0
        %v2273 = vadd.f32 %v2204, %v2272
        %2274 = vmatmul.f32.gmra.mxu0 %v2235
        %v2275 = vpop.f32.mrf.mxu0
        %v2276 = vadd.f32 %v2208, %v2275
        %2277 = vmatmul.f32.gmra.mxu0 %v2238
        %v2278 = vpop.f32.mrf.mxu0
        %v2279 = vadd.f32 %v2212, %v2278
        %2280 = vmatmul.f32.gmra.mxu0 %v2241
        %v2281 = vpop.f32.mrf.mxu0
        %v2282 = vadd.f32 %v2216, %v2281
        %2283 = vdwg.mxu0
        %v2284 = vld [vmem:[%s4] sm:$0xff]
        %v2285 = vld [vmem:[%s4 + $0x8] sm:$0xff]
        %v2286 = vld [vmem:[%s4 + $0x10] sm:$0xff]
        %v2287 = vld [vmem:[%s4 + $0x18] sm:$0xff]
        %v2289 = vsel %vm2218, %v2261, 0
        %v2292 = vsel %vm2218, %v2264, 0
        %v2295 = vsel %vm2218, %v2267, 0
        %v2298 = vsel %vm2218, %v2270, 0
        %v2301 = vsel %vm2218, %v2273, 0
        %v2304 = vsel %vm2218, %v2276, 0
        %v2307 = vsel %vm2218, %v2279, 0
        %v2310 = vsel %vm2218, %v2282, 0
        %2312 = vmatpush.msra.mxu0 0.0
        %2313 = vmatpush.msra.mxu0 0.0
        %2314 = vmatpush.msra.mxu0 0.0
        %2315 = vmatpush.msra.mxu0 0.0
        %2316 = vmatpush.msra.mxu0 0.0
        %2317 = vmatpush.msra.mxu0 0.0
        %2318 = vmatpush.msra.mxu0 0.0
        %2319 = vmatpush.msra.mxu0 0.0
        %2320 = vmatpush.msra.mxu0 0.0
        %2321 = vmatpush.msra.mxu0 0.0
        %2322 = vmatpush.msra.mxu0 0.0
        %2323 = vmatpush.msra.mxu0 0.0
        %2324 = vmatpush.msra.mxu0 %v2287
        %2325 = vmatpush.msra.mxu0 %v2286
        %2326 = vmatpush.msra.mxu0 %v2285
        %2327 = vmatpush.msra.mxu0 %v2284
        %2328 = vmatmul.f32.gmra.mxu0 %v2289
        %v2329 = vpop.f32.mrf.mxu0
        %v2330 = vadd.f32 0.0, %v2329
        %2331 = vmatmul.f32.gmra.mxu0 %v2292
        %v2332 = vpop.f32.mrf.mxu0
        %v2333 = vadd.f32 0.0, %v2332
        %2334 = vmatmul.f32.gmra.mxu0 %v2295
        %v2335 = vpop.f32.mrf.mxu0
        %v2336 = vadd.f32 0.0, %v2335
        %2337 = vmatmul.f32.gmra.mxu0 %v2298
        %v2338 = vpop.f32.mrf.mxu0
        %v2339 = vadd.f32 0.0, %v2338
        %2340 = vmatmul.f32.gmra.mxu0 %v2301
        %v2341 = vpop.f32.mrf.mxu0
        %v2342 = vadd.f32 0.0, %v2341
        %2343 = vmatmul.f32.gmra.mxu0 %v2304
        %v2344 = vpop.f32.mrf.mxu0
        %v2345 = vadd.f32 0.0, %v2344
        %2346 = vmatmul.f32.gmra.mxu0 %v2307
        %v2347 = vpop.f32.mrf.mxu0
        %v2348 = vadd.f32 0.0, %v2347
        %2349 = vmatmul.f32.gmra.mxu0 %v2310
        %v2350 = vpop.f32.mrf.mxu0
        %v2351 = vadd.f32 0.0, %v2350
        %2352 = vdwg.mxu0
        %2353 = vxpose.xlu0.b32.start [1/16] %v2330, 128
        %2354 = vxpose.xlu0.b32.cont [2/16] %v2333, 128
        %2355 = vxpose.xlu0.b32.cont [3/16] %v2336, 128
        %2356 = vxpose.xlu0.b32.cont [4/16] %v2339, 128
        %2357 = vxpose.xlu0.b32.cont [5/16] %v2342, 128
        %2358 = vxpose.xlu0.b32.cont [6/16] %v2345, 128
        %2359 = vxpose.xlu0.b32.cont [7/16] %v2348, 128
        %2360 = vxpose.xlu0.b32.cont [8/16] %v2351, 128
        %2361 = vxpose.xlu0.b32.cont [9/16] 0.0, 128
        %2362 = vxpose.xlu0.b32.cont [10/16] 0.0, 128
        %2363 = vxpose.xlu0.b32.cont [11/16] 0.0, 128
        %2364 = vxpose.xlu0.b32.cont [12/16] 0.0, 128
        %2365 = vxpose.xlu0.b32.cont [13/16] 0.0, 128
        %2366 = vxpose.xlu0.b32.cont [14/16] 0.0, 128
        %2367 = vxpose.xlu0.b32.cont [15/16] 0.0, 128
        %2368 = vxpose.xlu0.b32.end [16/16] 0.0, 128
        %v2369 = vpop.trf.xlu0
        %v2370 = vpop.trf.xlu0
        %v2371 = vpop.trf.xlu0
        %v2372 = vpop.trf.xlu0
        %v2373 = vpop.trf.xlu0
        %v2374 = vpop.trf.xlu0
        %v2375 = vpop.trf.xlu0
        %v2376 = vpop.trf.xlu0
        %v2377 = vpop.trf.xlu0
        %v2378 = vpop.trf.xlu0
        %v2379 = vpop.trf.xlu0
        %v2380 = vpop.trf.xlu0
        %v2381 = vpop.trf.xlu0
        %v2382 = vpop.trf.xlu0
        %v2383 = vpop.trf.xlu0
        %v2384 = vpop.trf.xlu0
        %v2385 = vld [vmem:[%s11] sm:$0xff]
        %v2386 = vld [vmem:[%s11 + $0x8] sm:$0xff]
        %v2387 = vld [vmem:[%s11 + $0x10] sm:$0xff]
        %v2388 = vld [vmem:[%s11 + $0x18] sm:$0xff]
        %v2389 = vld [vmem:[%s11 + $0x20] sm:$0xff]
        %v2390 = vld [vmem:[%s11 + $0x28] sm:$0xff]
        %v2391 = vld [vmem:[%s11 + $0x30] sm:$0xff]
        %v2392 = vld [vmem:[%s11 + $0x38] sm:$0xff]
        %v2393 = vld [vmem:[%s10 + $0x3] sm:$0x1]
        %v2395 = vperm.slane %v2393, 0
        %v2398 = vsel %vm1146, %v2369, 0
        %2400 = vmatpush.msra.mxu0 0.0
        %2401 = vmatpush.msra.mxu0 0.0
        %2402 = vmatpush.msra.mxu0 0.0
        %2403 = vmatpush.msra.mxu0 0.0
        %2404 = vmatpush.msra.mxu0 0.0
        %2405 = vmatpush.msra.mxu0 0.0
        %2406 = vmatpush.msra.mxu0 0.0
        %2407 = vmatpush.msra.mxu0 0.0
        %2408 = vmatpush.msra.mxu0 %v2392
        %2409 = vmatpush.msra.mxu0 %v2391
        %2410 = vmatpush.msra.mxu0 %v2390
        %2411 = vmatpush.msra.mxu0 %v2389
        %2412 = vmatpush.msra.mxu0 %v2388
        %2413 = vmatpush.msra.mxu0 %v2387
        %2414 = vmatpush.msra.mxu0 %v2386
        %2415 = vmatpush.msra.mxu0 %v2385
        %2416 = vmatmul.f32.gmra.mxu0 %v2398
        %v2417 = vpop.f32.mrf.mxu0
        %v2418 = vadd.f32 %v2395, %v2417
        %2419 = vdwg.mxu0
        %2420 = vst [vmem:[%s557] sm:$0xf] %v2418
        %s2421 = sand.u32 %s291, 1
        %s2422 = scalar_lea.sflag [#allocation4], %s2421
        %s2423 = sand.u32 %s291, 1
        %s2424 = smul.addr %s2423, 4
        %s2425 = scalar_lea.vmem [#allocation3], %s2424
        // Predicated region
        $region92: #{gcn_forward.1} parent=86 // pred_check
          %p2426 = pneg %p301
        $region93: #{gcn_forward.1} parent=86 // pred_check_branch
          %2428 = sbr.rel (%p2426) target = $region95
        $region94: #{gcn_forward.1} parent=86 // pred_region
          %2430 = vsyncadd %s2422, 0
          %s2431 = smul.addr %s26, 4
          %s2432 = scalar_lea.hbm %s12, %s2431
          %s2434 = sshll.u32 %s2425, 4
          %s2435 = int_to_ptr.vmem [resolvable:$true] %s2434
          %s2436 = sshll.u32 %s2432, 4
          %s2437 = int_to_ptr.hbm [resolvable:$true] %s2436
          %2439 = dma.vmem_to_hbm [thread:$0]  %s2435, 64, %s2437, %s2422
        $region95: #{gcn_forward.1} parent=86 // pred_fallthru
          _
      $region87: #{gcn_forward.1} parent=5 // pred_fallthru
        _
      %p2440 = scmp.le.s32.totalorder 2, %s21
      // Predicated region
      $region96: #{gcn_forward.1} parent=5 // pred_check
        %p2441 = pneg %p2440
      $region97: #{gcn_forward.1} parent=5 // pred_check_branch
        %2443 = sbr.rel (%p2441) target = $region99
      $region98: #{gcn_forward.1} parent=5 // pred_region
        %s2444 = ssub.s32 %s21, 2
        // Predicated region
        $region100: #{gcn_forward.1} parent=98 // pred_check
          %p2445 = pneg %p307
        $region101: #{gcn_forward.1} parent=98 // pred_check_branch
          %2447 = sbr.rel (%p2445) target = $region103
        $region102: #{gcn_forward.1} parent=98 // pred_region
          %s2448 = sand.u32 %s292, 1
          %s2449 = scalar_lea.sflag [#allocation4], %s2448
          %s2450 = sand.u32 %s292, 1
          %s2451 = smul.addr %s2450, 4
          %s2452 = scalar_lea.vmem [#allocation3], %s2451
          %2454 = dma.done %s2449, 64
        $region103: #{gcn_forward.1} parent=98 // pred_fallthru
          _
      $region99: #{gcn_forward.1} parent=5 // pred_fallthru
        _
    $region6: #{gcn_forward.1} parent=1 // loop_footer
      %s25 = sadd.s32 1, %s21
    $region7: #{gcn_forward.1} parent=1 // loop_footer_branch
      %20 = sbr.rel target = $region3
    $region8: #{gcn_forward.1} parent=1 // loop_exit
      _
    %2455 = vsyncpa [#allocation4], 1
    %s2456 = scalar_lea.sflag [#allocation4], 1
    %2457 = vsyncpa %s2456, 1

</llo_original>
